<compile_context>
chip_gen: v6e
topology: v6e:2x2x1
jax: 0.10.0
libtpu: 0.0.40
codegen_flags: <defaults>
</compile_context>

<pallas_src>
import jax
import jax.numpy as jnp
import numpy as np
from jax.experimental import pallas as pl
from jax.experimental.pallas import tpu as pltpu

# ----------------------------- hyper-parameters ------------------------------
PRICE_HORIZON  = 32                       # T
FEATURE_DIM    = 6                        # lin_features = feature_dim + 1 + 1
LIN_FEATURES   = FEATURE_DIM + 2          # 8
LIN_HIDDEN     = 32                       # lin_hidden_dim (half = 16)
CONV_HIDDEN    = 16                       # conv_hidden_dim
NUM_LAYERS     = 2                        # TCN blocks
KERNEL_SIZE    = 3
ACTION_CLASSES = 5
BATCH          = 4
NEG_SLOPE      = 0.01                     # nn.LeakyReLU default

TCN_CHANNELS = [CONV_HIDDEN] * NUM_LAYERS
TCN_CHANNELS[-1] = max(CONV_HIDDEN // 8, 1)          # -> [16, 2]
TEMP_OUT_DIM = TCN_CHANNELS[-1] * PRICE_HORIZON      # 64

LANES = 128                               # lane width of the param slab
SUBLANES = 8                              # sublane alignment of slab entries

# distinct non-zero causal shifts used by the dilated convs -> (1, 2, 4)
SHIFTS = tuple(sorted({(KERNEL_SIZE - 1 - k) * (2 ** l)
                       for l in range(NUM_LAYERS)
                       for k in range(KERNEL_SIZE)} - {0}))


# --------------------------------- kernel ------------------------------------
def make_kernel(off, batch):
    """Returns the fused kernel; `off` maps name -> (row, nrows, ncols) in the
    param slab (static Python ints at trace time -> zero-cost ref slices)."""
    B, T, LF, K = batch, PRICE_HORIZON, LIN_FEATURES, KERNEL_SIZE
    c_last = TCN_CHANNELS[-1]

    def kernel(slab_ref, x_ref, out_ref):
        def get(name):
            r, nr, nc = off[name]
            return slab_ref[r:r + nr, 0:nc]

        x = x_ref[...]                                     # (B, T+LF)
        feat = x[:, T:T + LF]                              # (B, LF) free lane slice

        # price column p[b*T+t, 0] = x[b, t]: batch-expansion matmul + masked
        # lane reduce (keeps the pallas_call the only dispatched op).
        xe = jnp.dot(get('ebt'), x, preferred_element_type=jnp.float32)    # (BT, T+LF)
        p = jnp.sum(xe * get('mprice'), axis=1, keepdims=True)             # (BT, 1)

        # hoisted causal masks (f32 0/1), one column per distinct shift
        mcols = get('masks')                               # (BT, len(SHIFTS))
        mask = {s: mcols[:, i:i + 1] for i, s in enumerate(SHIFTS)}

        def shifted(h, s):
            """h[b*T+t] -> h[b*T+t-s], zero-padded causally per batch element."""
            if s == 0:
                return h
            return pltpu.roll(h, s, 0) * mask[s]           # sublane roll + f32 mask

        def conv(h, wname, bname, d):
            c_in = h.shape[1]
            w = get(wname)                                 # (K*c_in, c_out)
            shifts = [(K - 1 - k) * d for k in range(K)]
            if c_in == 1:                                  # VPU-only path, no MXU issue
                acc = None
                for k, s in enumerate(shifts):
                    term = shifted(h, s) * w[k:k + 1, :]   # (BT,1)*(1,c_out)
                    acc = term if acc is None else acc + term
            else:                                          # all taps in ONE MXU matmul
                hs = jnp.concatenate([shifted(h, s) for s in shifts], axis=1)
                acc = jnp.dot(hs, w, preferred_element_type=jnp.float32)
            return acc + get(bname)

        relu = lambda v: jnp.maximum(v, 0.0)
        leaky = lambda v: jnp.maximum(v, NEG_SLOPE * v)    # mul+max, no cmp/select

        # ------------------------------- TCN ---------------------------------
        h = p                                              # (BT, 1)
        for layer in range(NUM_LAYERS):
            d = 2 ** layer
            o = relu(conv(h, f'l{layer}_w1', f'l{layer}_b1', d))  # dropout = id (eval)
            o = relu(conv(o, f'l{layer}_w2', f'l{layer}_b2', d))
            wd, bd = get(f'l{layer}_wd'), get(f'l{layer}_bd')
            if h.shape[1] == 1:                            # 1x1 downsample, Cin == 1
                res = h * wd + bd
            else:
                res = jnp.dot(h, wd, preferred_element_type=jnp.float32) + bd
            h = relu(o + res)                              # (BT, C_layer)

        # ------------------------------- MLP ----------------------------------
        lin = leaky(jnp.dot(feat, get('lw1'),
                            preferred_element_type=jnp.float32) + get('lb1'))
        lin = leaky(jnp.dot(lin, get('lw2'),
                            preferred_element_type=jnp.float32) + get('lb2'))

        # linear3 temp slice: torch's channel-major flatten of the (B, C, T) TCN
        # output = per-channel broadcast multiply with the (T, L) weight block
        # (tiled over batch in-register) + one per-batch segment-sum matmul.
        w3a = get('w3a')                                   # (c_last*T, L) rows = c*T+t
        m = None
        for c in range(c_last):
            wc = w3a[c * T:(c + 1) * T, :]                 # (T, L)
            wct = jnp.concatenate([wc] * B, axis=0)        # (BT, L) tile over batch
            term = h[:, c:c + 1] * wct
            m = term if m is None else m + term
        temp3 = jnp.dot(get('seg'), m, preferred_element_type=jnp.float32)  # (B, L)

        h3 = leaky(temp3
                   + jnp.dot(lin, get('w3b'), preferred_element_type=jnp.float32)
                   + get('b3'))
        # dropout: identity (eval)
        out_ref[...] = (jnp.dot(h3, get('wo'), preferred_element_type=jnp.float32)
                        + get('bo'))

    return kernel


# -------------------------------- wrapper -------------------------------------
def build_forward(offsets, batch):
    kernel = make_kernel(offsets, batch)
    vmem = pl.BlockSpec(memory_space=pltpu.MemorySpace.VMEM)

    @jax.jit
    def forward(x, slab):
        return pl.pallas_call(
            kernel,
            out_shape=jax.ShapeDtypeStruct((batch, ACTION_CLASSES), jnp.float32),
            in_specs=[vmem, vmem],
            out_specs=pl.BlockSpec(memory_space=pltpu.MemorySpace.VMEM),
        )(slab, x)

    return forward


# ------------------------------ param init -----------------------------------
def init_params(key):
    keys = iter(jax.random.split(key, 32))

    def nrm(shape, scale=0.2):
        return scale * jax.random.normal(next(keys), shape, jnp.float32)

    K = KERNEL_SIZE
    tcn_params = []
    c_in = 1
    for c_out in TCN_CHANNELS:
        tcn_params.append((
            nrm((K, c_in, c_out)),    # conv1 W (tap, Cin, Cout)
            nrm((1, c_out)),          # conv1 b
            nrm((K, c_out, c_out)),   # conv2 W
            nrm((1, c_out)),          # conv2 b
            nrm((c_in, c_out)),       # downsample 1x1 W
            nrm((1, c_out)),          # downsample b
        ))
        c_in = c_out

    H2 = LIN_HIDDEN // 2
    mlp_params = (
        nrm((LIN_FEATURES, H2)), nrm((1, H2)),                        # linear1
        nrm((H2, H2)), nrm((1, H2)),                                  # linear2
        nrm((TEMP_OUT_DIM, LIN_HIDDEN)),                              # linear3 (temp slice, rows = c*T+t)
        nrm((H2, LIN_HIDDEN)),                                        # linear3 (lin slice)
        nrm((1, LIN_HIDDEN)),                                         # linear3 bias
        nrm((LIN_HIDDEN, ACTION_CLASSES)), nrm((1, ACTION_CLASSES)),  # out
    )
    return tuple(tcn_params), mlp_params


def pack_params(tcn_params, mlp_params, batch):
    """One-time layout plumbing: pack every parameter / aux constant into ONE
    (rows, 128) f32 slab.  Each entry starts at an 8-row aligned offset so all
    in-kernel static slices are aligned loads.  Returns (slab, offsets)."""
    B, T, LF = batch, PRICE_HORIZON, LIN_FEATURES

    r = np.arange(B * T)
    t = r % T
    b = r // T
    ebt = (b[:, None] == np.arange(B)[None, :]).astype(np.float32)            # (BT, B)
    mprice = (np.arange(T + LF)[None, :] == t[:, None]).astype(np.float32)    # (BT, T+LF)
    masks = np.stack([(t >= s).astype(np.float32) for s in SHIFTS], axis=1)   # (BT, |SHIFTS|)
    seg = ebt.T.copy()                                                        # (B, BT)

    entries = [('ebt', ebt), ('mprice', mprice), ('masks', masks), ('seg', seg)]

    for layer, (w1, b1, w2, b2, wd, bd) in enumerate(tcn_params):
        w1 = np.asarray(w1); w2 = np.asarray(w2)
        entries += [
            (f'l{layer}_w1', w1.reshape(-1, w1.shape[-1])),   # (K*Cin, Cout), rows = (k, ci)
            (f'l{layer}_b1', np.asarray(b1)),
            (f'l{layer}_w2', w2.reshape(-1, w2.shape[-1])),
            (f'l{layer}_b2', np.asarray(b2)),
            (f'l{layer}_wd', np.asarray(wd)),
            (f'l{layer}_bd', np.asarray(bd)),
        ]

    lw1, lb1, lw2, lb2, w3a, w3b, b3, wo, bo = mlp_params
    entries += [('lw1', lw1), ('lb1', lb1), ('lw2', lw2), ('lb2', lb2),
                ('w3a', w3a), ('w3b', w3b), ('b3', b3), ('wo', wo), ('bo', bo)]

    offsets, rows, row = {}, [], 0
    for name, a in entries:
        a = np.asarray(a, np.float32)
        assert a.ndim == 2 and a.shape[1] <= LANES, (name, a.shape)
        pad = (-row) % SUBLANES
        if pad:
            rows.append(np.zeros((pad, LANES), np.float32)); row += pad
        offsets[name] = (row, a.shape[0], a.shape[1])
        rows.append(np.pad(a, ((0, 0), (0, LANES - a.shape[1]))))
        row += a.shape[0]
    pad = (-row) % SUBLANES
    if pad:
        rows.append(np.zeros((pad, LANES), np.float32))
    slab = jnp.asarray(np.concatenate(rows, axis=0))
    return slab, offsets


# ------------------------------ pure-JAX ref ----------------------------------
def ref_forward(x, tcn_params, mlp_params):
    with jax.default_matmul_precision("float32"):
        B = x.shape[0]
        p = x[:, :PRICE_HORIZON][:, :, None]                  # (B, T, 1)
        feat = x[:, PRICE_HORIZON:]
        h = p
        for layer in range(NUM_LAYERS):
            w1, b1, w2, b2, wd, bd = tcn_params[layer]
            d = 2 ** layer

            def conv(hh, w, b):
                out = 0.0
                for k in range(KERNEL_SIZE):
                    s = (KERNEL_SIZE - 1 - k) * d
                    hs = jnp.pad(hh, ((0, 0), (s, 0), (0, 0)))[:, :PRICE_HORIZON, :]
                    out = out + jnp.einsum("btc,co->bto", hs, w[k])
                return out + b[None]

            o = jax.nn.relu(conv(h, w1, b1))
            o = jax.nn.relu(conv(o, w2, b2))
            res = jnp.einsum("btc,co->bto", h, wd) + bd[None]
            h = jax.nn.relu(o + res)
        # PyTorch flatten(start_dim=1) of NCT output is channel-major:
        temp = jnp.transpose(h, (0, 2, 1)).reshape(B, TEMP_OUT_DIM)
        w1, b1, w2, b2, w3a, w3b, b3, wo, bo = mlp_params
        leaky = lambda v: jnp.where(v >= 0, v, NEG_SLOPE * v)
        lin = leaky(feat @ w1 + b1)
        lin = leaky(lin @ w2 + b2)
        hh = leaky(temp @ w3a + lin @ w3b + b3)
        return hh @ wo + bo


# ---------------------------------- main --------------------------------------
if __name__ == "__main__":
    key = jax.random.PRNGKey(0)
    pkey, xkey = jax.random.split(key)
    tcn_params, mlp_params = init_params(pkey)
    slab, offsets = pack_params(tcn_params, mlp_params, BATCH)
    forward = build_forward(offsets, BATCH)

    # observation = [price_horizon prices | feature_dim + 2 extra features]
    x = jax.random.normal(xkey, (BATCH, PRICE_HORIZON + LIN_FEATURES), jnp.float32)

    q = forward(x, slab)
    q = jax.block_until_ready(q)

    q_ref = ref_forward(x, tcn_params, mlp_params)
    assert q.shape == (BATCH, ACTION_CLASSES)
    np.testing.assert_allclose(np.asarray(q), np.asarray(q_ref), rtol=1e-2, atol=1e-2)
    print("KERNEL_OK")
</pallas_src>

<mosaic_0001>
module attributes {stable_mosaic.version = 11 : i64} {
  func.func @kernel(%arg0: memref<744x128xf32, #tpu.memory_space<vmem>>, %arg1: memref<4x40xf32, #tpu.memory_space<vmem>>, %arg2: memref<4x5xf32, #tpu.memory_space<vmem>>) attributes {dimension_semantics = [], scalar_prefetch = 0 : i64, scratch_operands = 0 : i64, tpu.core_type = #tpu.core_type<tc>} {
    %c0 = arith.constant 0 : index
    %c0_0 = arith.constant 0 : index
    %0 = vector.load %arg1[%c0, %c0_0] : memref<4x40xf32, #tpu.memory_space<vmem>>, vector<4x40xf32>
    %1 = vector.extract_strided_slice %0 {offsets = [0, 32], sizes = [4, 8], strides = [1, 1]} : vector<4x40xf32> to vector<4x8xf32>
    %c0_1 = arith.constant 0 : index
    %c0_2 = arith.constant 0 : index
    %2 = vector.load %arg0[%c0_1, %c0_2] : memref<744x128xf32, #tpu.memory_space<vmem>>, vector<128x4xf32>
    %cst = arith.constant dense<0.000000e+00> : vector<128x40xf32>
    %3 = tpu.matmul %2, %0, %cst {dimension_numbers = #tpu.dot_dimension_numbers<[1], [0], [0], [1], [0, 0, 1, 1], [], []>} : vector<128x4xf32>, vector<4x40xf32>, vector<128x40xf32> -> vector<128x40xf32>
    %c128 = arith.constant 128 : index
    %c0_3 = arith.constant 0 : index
    %4 = vector.load %arg0[%c128, %c0_3] : memref<744x128xf32, #tpu.memory_space<vmem>>, vector<128x40xf32>
    %5 = arith.mulf %3, %4 : vector<128x40xf32>
    %cst_4 = arith.constant dense<0.000000e+00> : vector<128xf32>
    %6 = vector.multi_reduction <add>, %5, %cst_4 [1] : vector<128x40xf32> to vector<128xf32>
    %7 = vector.shape_cast %6 : vector<128xf32> to vector<128x1xf32>
    %c256 = arith.constant 256 : index
    %c0_5 = arith.constant 0 : index
    %8 = vector.load %arg0[%c256, %c0_5] : memref<744x128xf32, #tpu.memory_space<vmem>>, vector<128x3xf32>
    %9 = vector.extract_strided_slice %8 {offsets = [0, 0], sizes = [128, 1], strides = [1, 1]} : vector<128x3xf32> to vector<128x1xf32>
    %10 = vector.extract_strided_slice %8 {offsets = [0, 1], sizes = [128, 1], strides = [1, 1]} : vector<128x3xf32> to vector<128x1xf32>
    %11 = vector.extract_strided_slice %8 {offsets = [0, 2], sizes = [128, 1], strides = [1, 1]} : vector<128x3xf32> to vector<128x1xf32>
    %c392 = arith.constant 392 : index
    %c0_6 = arith.constant 0 : index
    %12 = vector.load %arg0[%c392, %c0_6] : memref<744x128xf32, #tpu.memory_space<vmem>>, vector<3x16xf32>
    %c2_i32 = arith.constant 2 : i32
    %13 = tpu.dynamic_rotate %7 by %c2_i32 dim 0 : vector<128x1xf32>, i32 -> vector<128x1xf32>
    %14 = arith.mulf %13, %10 : vector<128x1xf32>
    %15 = vector.extract_strided_slice %12 {offsets = [0, 0], sizes = [1, 16], strides = [1, 1]} : vector<3x16xf32> to vector<1x16xf32>
    %16 = vector.broadcast %14 : vector<128x1xf32> to vector<128x16xf32>
    %17 = vector.broadcast %15 : vector<1x16xf32> to vector<128x16xf32>
    %18 = arith.mulf %16, %17 : vector<128x16xf32>
    %c1_i32 = arith.constant 1 : i32
    %19 = tpu.dynamic_rotate %7 by %c1_i32 dim 0 : vector<128x1xf32>, i32 -> vector<128x1xf32>
    %20 = arith.mulf %19, %9 : vector<128x1xf32>
    %21 = vector.extract_strided_slice %12 {offsets = [1, 0], sizes = [1, 16], strides = [1, 1]} : vector<3x16xf32> to vector<1x16xf32>
    %22 = vector.broadcast %20 : vector<128x1xf32> to vector<128x16xf32>
    %23 = vector.broadcast %21 : vector<1x16xf32> to vector<128x16xf32>
    %24 = arith.mulf %22, %23 : vector<128x16xf32>
    %25 = arith.addf %18, %24 : vector<128x16xf32>
    %26 = vector.extract_strided_slice %12 {offsets = [2, 0], sizes = [1, 16], strides = [1, 1]} : vector<3x16xf32> to vector<1x16xf32>
    %27 = vector.broadcast %7 : vector<128x1xf32> to vector<128x16xf32>
    %28 = vector.broadcast %26 : vector<1x16xf32> to vector<128x16xf32>
    %29 = arith.mulf %27, %28 : vector<128x16xf32>
    %30 = arith.addf %25, %29 : vector<128x16xf32>
    %c400 = arith.constant 400 : index
    %c0_7 = arith.constant 0 : index
    %31 = vector.load %arg0[%c400, %c0_7] : memref<744x128xf32, #tpu.memory_space<vmem>>, vector<1x16xf32>
    %32 = vector.broadcast %31 : vector<1x16xf32> to vector<128x16xf32>
    %33 = arith.addf %30, %32 : vector<128x16xf32>
    %cst_8 = arith.constant 0.000000e+00 : f32
    %34 = vector.broadcast %cst_8 : f32 to vector<128x16xf32>
    %35 = arith.maximumf %33, %34 : vector<128x16xf32>
    %c408 = arith.constant 408 : index
    %c0_9 = arith.constant 0 : index
    %36 = vector.load %arg0[%c408, %c0_9] : memref<744x128xf32, #tpu.memory_space<vmem>>, vector<48x16xf32>
    %c2_i32_10 = arith.constant 2 : i32
    %37 = tpu.dynamic_rotate %35 by %c2_i32_10 dim 0 : vector<128x16xf32>, i32 -> vector<128x16xf32>
    %38 = vector.broadcast %10 : vector<128x1xf32> to vector<128x16xf32>
    %39 = arith.mulf %37, %38 : vector<128x16xf32>
    %c1_i32_11 = arith.constant 1 : i32
    %40 = tpu.dynamic_rotate %35 by %c1_i32_11 dim 0 : vector<128x16xf32>, i32 -> vector<128x16xf32>
    %41 = vector.broadcast %9 : vector<128x1xf32> to vector<128x16xf32>
    %42 = arith.mulf %40, %41 : vector<128x16xf32>
    %43 = tpu.concatenate %39, %42, %35 in 1 : vector<128x16xf32>, vector<128x16xf32>, vector<128x16xf32> -> vector<128x48xf32>
    %cst_12 = arith.constant dense<0.000000e+00> : vector<128x16xf32>
    %44 = tpu.matmul %43, %36, %cst_12 {dimension_numbers = #tpu.dot_dimension_numbers<[1], [0], [0], [1], [0, 0, 1, 1], [], []>} : vector<128x48xf32>, vector<48x16xf32>, vector<128x16xf32> -> vector<128x16xf32>
    %c456 = arith.constant 456 : index
    %c0_13 = arith.constant 0 : index
    %45 = vector.load %arg0[%c456, %c0_13] : memref<744x128xf32, #tpu.memory_space<vmem>>, vector<1x16xf32>
    %46 = vector.broadcast %45 : vector<1x16xf32> to vector<128x16xf32>
    %47 = arith.addf %44, %46 : vector<128x16xf32>
    %cst_14 = arith.constant 0.000000e+00 : f32
    %48 = vector.broadcast %cst_14 : f32 to vector<128x16xf32>
    %49 = arith.maximumf %47, %48 : vector<128x16xf32>
    %c464 = arith.constant 464 : index
    %c0_15 = arith.constant 0 : index
    %50 = vector.load %arg0[%c464, %c0_15] : memref<744x128xf32, #tpu.memory_space<vmem>>, vector<1x16xf32>
    %c472 = arith.constant 472 : index
    %c0_16 = arith.constant 0 : index
    %51 = vector.load %arg0[%c472, %c0_16] : memref<744x128xf32, #tpu.memory_space<vmem>>, vector<1x16xf32>
    %52 = vector.broadcast %7 : vector<128x1xf32> to vector<128x16xf32>
    %53 = vector.broadcast %50 : vector<1x16xf32> to vector<128x16xf32>
    %54 = arith.mulf %52, %53 : vector<128x16xf32>
    %55 = vector.broadcast %51 : vector<1x16xf32> to vector<128x16xf32>
    %56 = arith.addf %54, %55 : vector<128x16xf32>
    %57 = arith.addf %49, %56 : vector<128x16xf32>
    %cst_17 = arith.constant 0.000000e+00 : f32
    %58 = vector.broadcast %cst_17 : f32 to vector<128x16xf32>
    %59 = arith.maximumf %57, %58 : vector<128x16xf32>
    %c480 = arith.constant 480 : index
    %c0_18 = arith.constant 0 : index
    %60 = vector.load %arg0[%c480, %c0_18] : memref<744x128xf32, #tpu.memory_space<vmem>>, vector<48x2xf32>
    %c4_i32 = arith.constant 4 : i32
    %61 = tpu.dynamic_rotate %59 by %c4_i32 dim 0 : vector<128x16xf32>, i32 -> vector<128x16xf32>
    %62 = vector.broadcast %11 : vector<128x1xf32> to vector<128x16xf32>
    %63 = arith.mulf %61, %62 : vector<128x16xf32>
    %c2_i32_19 = arith.constant 2 : i32
    %64 = tpu.dynamic_rotate %59 by %c2_i32_19 dim 0 : vector<128x16xf32>, i32 -> vector<128x16xf32>
    %65 = vector.broadcast %10 : vector<128x1xf32> to vector<128x16xf32>
    %66 = arith.mulf %64, %65 : vector<128x16xf32>
    %67 = tpu.concatenate %63, %66, %59 in 1 : vector<128x16xf32>, vector<128x16xf32>, vector<128x16xf32> -> vector<128x48xf32>
    %cst_20 = arith.constant dense<0.000000e+00> : vector<128x2xf32>
    %68 = tpu.matmul %67, %60, %cst_20 {dimension_numbers = #tpu.dot_dimension_numbers<[1], [0], [0], [1], [0, 0, 1, 1], [], []>} : vector<128x48xf32>, vector<48x2xf32>, vector<128x2xf32> -> vector<128x2xf32>
    %c528 = arith.constant 528 : index
    %c0_21 = arith.constant 0 : index
    %69 = vector.load %arg0[%c528, %c0_21] : memref<744x128xf32, #tpu.memory_space<vmem>>, vector<1x2xf32>
    %70 = vector.broadcast %69 : vector<1x2xf32> to vector<128x2xf32>
    %71 = arith.addf %68, %70 : vector<128x2xf32>
    %cst_22 = arith.constant 0.000000e+00 : f32
    %72 = vector.broadcast %cst_22 : f32 to vector<128x2xf32>
    %73 = arith.maximumf %71, %72 : vector<128x2xf32>
    %c536 = arith.constant 536 : index
    %c0_23 = arith.constant 0 : index
    %74 = vector.load %arg0[%c536, %c0_23] : memref<744x128xf32, #tpu.memory_space<vmem>>, vector<6x2xf32>
    %c4_i32_24 = arith.constant 4 : i32
    %75 = tpu.dynamic_rotate %73 by %c4_i32_24 dim 0 : vector<128x2xf32>, i32 -> vector<128x2xf32>
    %76 = vector.broadcast %11 : vector<128x1xf32> to vector<128x2xf32>
    %77 = arith.mulf %75, %76 : vector<128x2xf32>
    %c2_i32_25 = arith.constant 2 : i32
    %78 = tpu.dynamic_rotate %73 by %c2_i32_25 dim 0 : vector<128x2xf32>, i32 -> vector<128x2xf32>
    %79 = vector.broadcast %10 : vector<128x1xf32> to vector<128x2xf32>
    %80 = arith.mulf %78, %79 : vector<128x2xf32>
    %81 = tpu.concatenate %77, %80, %73 in 1 : vector<128x2xf32>, vector<128x2xf32>, vector<128x2xf32> -> vector<128x6xf32>
    %cst_26 = arith.constant dense<0.000000e+00> : vector<128x2xf32>
    %82 = tpu.matmul %81, %74, %cst_26 {dimension_numbers = #tpu.dot_dimension_numbers<[1], [0], [0], [1], [0, 0, 1, 1], [], []>} : vector<128x6xf32>, vector<6x2xf32>, vector<128x2xf32> -> vector<128x2xf32>
    %c544 = arith.constant 544 : index
    %c0_27 = arith.constant 0 : index
    %83 = vector.load %arg0[%c544, %c0_27] : memref<744x128xf32, #tpu.memory_space<vmem>>, vector<1x2xf32>
    %84 = vector.broadcast %83 : vector<1x2xf32> to vector<128x2xf32>
    %85 = arith.addf %82, %84 : vector<128x2xf32>
    %cst_28 = arith.constant 0.000000e+00 : f32
    %86 = vector.broadcast %cst_28 : f32 to vector<128x2xf32>
    %87 = arith.maximumf %85, %86 : vector<128x2xf32>
    %c552 = arith.constant 552 : index
    %c0_29 = arith.constant 0 : index
    %88 = vector.load %arg0[%c552, %c0_29] : memref<744x128xf32, #tpu.memory_space<vmem>>, vector<16x2xf32>
    %c568 = arith.constant 568 : index
    %c0_30 = arith.constant 0 : index
    %89 = vector.load %arg0[%c568, %c0_30] : memref<744x128xf32, #tpu.memory_space<vmem>>, vector<1x2xf32>
    %cst_31 = arith.constant dense<0.000000e+00> : vector<128x2xf32>
    %90 = tpu.matmul %59, %88, %cst_31 {dimension_numbers = #tpu.dot_dimension_numbers<[1], [0], [0], [1], [0, 0, 1, 1], [], []>} : vector<128x16xf32>, vector<16x2xf32>, vector<128x2xf32> -> vector<128x2xf32>
    %91 = vector.broadcast %89 : vector<1x2xf32> to vector<128x2xf32>
    %92 = arith.addf %90, %91 : vector<128x2xf32>
    %93 = arith.addf %87, %92 : vector<128x2xf32>
    %cst_32 = arith.constant 0.000000e+00 : f32
    %94 = vector.broadcast %cst_32 : f32 to vector<128x2xf32>
    %95 = arith.maximumf %93, %94 : vector<128x2xf32>
    %c576 = arith.constant 576 : index
    %c0_33 = arith.constant 0 : index
    %96 = vector.load %arg0[%c576, %c0_33] : memref<744x128xf32, #tpu.memory_space<vmem>>, vector<8x16xf32>
    %cst_34 = arith.constant dense<0.000000e+00> : vector<4x16xf32>
    %97 = tpu.matmul %1, %96, %cst_34 {dimension_numbers = #tpu.dot_dimension_numbers<[1], [0], [0], [1], [0, 0, 1, 1], [], []>} : vector<4x8xf32>, vector<8x16xf32>, vector<4x16xf32> -> vector<4x16xf32>
    %c584 = arith.constant 584 : index
    %c0_35 = arith.constant 0 : index
    %98 = vector.load %arg0[%c584, %c0_35] : memref<744x128xf32, #tpu.memory_space<vmem>>, vector<1x16xf32>
    %99 = vector.broadcast %98 : vector<1x16xf32> to vector<4x16xf32>
    %100 = arith.addf %97, %99 : vector<4x16xf32>
    %cst_36 = arith.constant 0.00999999977 : f32
    %101 = vector.broadcast %cst_36 : f32 to vector<4x16xf32>
    %102 = arith.mulf %101, %100 : vector<4x16xf32>
    %103 = arith.maximumf %100, %102 : vector<4x16xf32>
    %c592 = arith.constant 592 : index
    %c0_37 = arith.constant 0 : index
    %104 = vector.load %arg0[%c592, %c0_37] : memref<744x128xf32, #tpu.memory_space<vmem>>, vector<16x16xf32>
    %cst_38 = arith.constant dense<0.000000e+00> : vector<4x16xf32>
    %105 = tpu.matmul %103, %104, %cst_38 {dimension_numbers = #tpu.dot_dimension_numbers<[1], [0], [0], [1], [0, 0, 1, 1], [], []>} : vector<4x16xf32>, vector<16x16xf32>, vector<4x16xf32> -> vector<4x16xf32>
    %c608 = arith.constant 608 : index
    %c0_39 = arith.constant 0 : index
    %106 = vector.load %arg0[%c608, %c0_39] : memref<744x128xf32, #tpu.memory_space<vmem>>, vector<1x16xf32>
    %107 = vector.broadcast %106 : vector<1x16xf32> to vector<4x16xf32>
    %108 = arith.addf %105, %107 : vector<4x16xf32>
    %cst_40 = arith.constant 0.00999999977 : f32
    %109 = vector.broadcast %cst_40 : f32 to vector<4x16xf32>
    %110 = arith.mulf %109, %108 : vector<4x16xf32>
    %111 = arith.maximumf %108, %110 : vector<4x16xf32>
    %c616 = arith.constant 616 : index
    %c0_41 = arith.constant 0 : index
    %112 = vector.load %arg0[%c616, %c0_41] : memref<744x128xf32, #tpu.memory_space<vmem>>, vector<64x32xf32>
    %113 = vector.extract_strided_slice %112 {offsets = [0, 0], sizes = [32, 32], strides = [1, 1]} : vector<64x32xf32> to vector<32x32xf32>
    %114 = tpu.concatenate %113, %113, %113, %113 in 0 : vector<32x32xf32>, vector<32x32xf32>, vector<32x32xf32>, vector<32x32xf32> -> vector<128x32xf32>
    %115 = vector.extract_strided_slice %95 {offsets = [0, 0], sizes = [128, 1], strides = [1, 1]} : vector<128x2xf32> to vector<128x1xf32>
    %116 = vector.broadcast %115 : vector<128x1xf32> to vector<128x32xf32>
    %117 = arith.mulf %116, %114 : vector<128x32xf32>
    %118 = vector.extract_strided_slice %112 {offsets = [32, 0], sizes = [32, 32], strides = [1, 1]} : vector<64x32xf32> to vector<32x32xf32>
    %119 = tpu.concatenate %118, %118, %118, %118 in 0 : vector<32x32xf32>, vector<32x32xf32>, vector<32x32xf32>, vector<32x32xf32> -> vector<128x32xf32>
    %120 = vector.extract_strided_slice %95 {offsets = [0, 1], sizes = [128, 1], strides = [1, 1]} : vector<128x2xf32> to vector<128x1xf32>
    %121 = vector.broadcast %120 : vector<128x1xf32> to vector<128x32xf32>
    %122 = arith.mulf %121, %119 : vector<128x32xf32>
    %123 = arith.addf %117, %122 : vector<128x32xf32>
    %c384 = arith.constant 384 : index
    %c0_42 = arith.constant 0 : index
    %124 = vector.load %arg0[%c384, %c0_42] : memref<744x128xf32, #tpu.memory_space<vmem>>, vector<4x128xf32>
    %cst_43 = arith.constant dense<0.000000e+00> : vector<4x32xf32>
    %125 = tpu.matmul %124, %123, %cst_43 {dimension_numbers = #tpu.dot_dimension_numbers<[1], [0], [0], [1], [0, 0, 1, 1], [], []>} : vector<4x128xf32>, vector<128x32xf32>, vector<4x32xf32> -> vector<4x32xf32>
    %c680 = arith.constant 680 : index
    %c0_44 = arith.constant 0 : index
    %126 = vector.load %arg0[%c680, %c0_44] : memref<744x128xf32, #tpu.memory_space<vmem>>, vector<16x32xf32>
    %cst_45 = arith.constant dense<0.000000e+00> : vector<4x32xf32>
    %127 = tpu.matmul %111, %126, %cst_45 {dimension_numbers = #tpu.dot_dimension_numbers<[1], [0], [0], [1], [0, 0, 1, 1], [], []>} : vector<4x16xf32>, vector<16x32xf32>, vector<4x32xf32> -> vector<4x32xf32>
    %128 = arith.addf %125, %127 : vector<4x32xf32>
    %c696 = arith.constant 696 : index
    %c0_46 = arith.constant 0 : index
    %129 = vector.load %arg0[%c696, %c0_46] : memref<744x128xf32, #tpu.memory_space<vmem>>, vector<1x32xf32>
    %130 = vector.broadcast %129 : vector<1x32xf32> to vector<4x32xf32>
    %131 = arith.addf %128, %130 : vector<4x32xf32>
    %cst_47 = arith.constant 0.00999999977 : f32
    %132 = vector.broadcast %cst_47 : f32 to vector<4x32xf32>
    %133 = arith.mulf %132, %131 : vector<4x32xf32>
    %134 = arith.maximumf %131, %133 : vector<4x32xf32>
    %c704 = arith.constant 704 : index
    %c0_48 = arith.constant 0 : index
    %135 = vector.load %arg0[%c704, %c0_48] : memref<744x128xf32, #tpu.memory_space<vmem>>, vector<32x5xf32>
    %cst_49 = arith.constant dense<0.000000e+00> : vector<4x5xf32>
    %136 = tpu.matmul %134, %135, %cst_49 {dimension_numbers = #tpu.dot_dimension_numbers<[1], [0], [0], [1], [0, 0, 1, 1], [], []>} : vector<4x32xf32>, vector<32x5xf32>, vector<4x5xf32> -> vector<4x5xf32>
    %c736 = arith.constant 736 : index
    %c0_50 = arith.constant 0 : index
    %137 = vector.load %arg0[%c736, %c0_50] : memref<744x128xf32, #tpu.memory_space<vmem>>, vector<1x5xf32>
    %138 = vector.broadcast %137 : vector<1x5xf32> to vector<4x5xf32>
    %139 = arith.addf %136, %138 : vector<4x5xf32>
    %c0_51 = arith.constant 0 : index
    %c0_52 = arith.constant 0 : index
    %140 = vector.load %arg2[%c0_51, %c0_52] : memref<4x5xf32, #tpu.memory_space<vmem>>, vector<4x5xf32>
    tpu.vector_store %arg2[%c0_51, %c0_52], %139 {strides = array<i32>} : memref<4x5xf32, #tpu.memory_space<vmem>>, vector<4x5xf32>,
    return
  }
}

</mosaic_0001>

<llo_original>
// kernel: forward.1
$region0: #{forward.1}
  #allocation0 [shape = 'u32[]', space=smem, size = 0x4, offset = 0x4, fixed_abs, tag = 'smem constant byte address 0x4 - core index']
  #allocation1 [shape = 'u32[144,128]{1,0:T(1,128)}', space=vmem, size = 0x12000, scoped, tag = 'internal scratch']
  %s0 = inlined_call_operand.hbm [shape: f32[744,128], index: 0, kind: input, shape index: {}]
  %s1 = inlined_call_operand.hbm [shape: f32[4,40], index: 1, kind: input, shape index: {}]
  %s2 = inlined_call_operand.hbm [shape: f32[4,5], index: 2, kind: output, shape index: {}]
  %s3 = sld [smem:[#allocation0]]
  $region26: #{forward.1} parent=0
    _
  %s5 = ssub.s32 1, %s3
  %s6 = scalar_select 0, %s5, %s3
  $region1: #{forward.1} parent=0
    #allocation2 [shape = 'u8[380928]{0}', space=vmem, size = 0x5d000, scoped, tag = 'input window, operand 0, single buffered']
    #allocation3 [shape = 's32[1]{0}', space=sflag, size = 0x4, scoped, tag = 'scoped memory for forward.1']
    #allocation4 [shape = 's32[1]{0}', space=sflag, size = 0x4, scoped, tag = 'scoped memory for forward.1']
    #allocation5 [shape = 'u8[2048]{0}', space=vmem, size = 0x800, scoped, tag = 'input window, operand 1, single buffered']
    #allocation6 [shape = 's32[1]{0}', space=sflag, size = 0x4, scoped, tag = 'scoped memory for forward.1']
    #allocation7 [shape = 'u8[2048]{0}', space=vmem, size = 0x800, scoped, tag = 'output window, operand 0, single buffered']
    %7 = vsyncpa [#allocation3], 0
    %8 = vsyncpa [#allocation6], 0
    %9 = vsyncpa [#allocation4], 0
    // Predicated region
    $region2: #{forward.1} parent=1 // pred_check
      _
    $region3: #{forward.1} parent=1 // pred_check_branch
      %11 = sbr.rel (0) target = $region5
    $region4: #{forward.1} parent=1 // pred_region
      %s13 = ssub.s32 11904, 11904
      %14 = vsyncadd [#allocation3], %s13
      %s15 = sshll.u32 [#allocation2], 4
      %s16 = int_to_ptr.vmem [resolvable:$true] %s15
      %21 = dma.hbm_to_vmem [thread:$0]  %s0, 11904, %s16, [#allocation3], 128, 128, 8
    $region5: #{forward.1} parent=1 // pred_fallthru
      _
    // Predicated region
    $region6: #{forward.1} parent=1 // pred_check
      _
    $region7: #{forward.1} parent=1 // pred_check_branch
      %23 = sbr.rel (0) target = $region9
    $region8: #{forward.1} parent=1 // pred_region
      %s25 = ssub.s32 64, 64
      %26 = vsyncadd [#allocation6], %s25
      %s28 = sshll.u32 [#allocation5], 4
      %s29 = int_to_ptr.vmem [resolvable:$true] %s28
      %31 = dma.hbm_to_vmem [thread:$0]  %s1, 64, %s29, [#allocation6]
    $region9: #{forward.1} parent=1 // pred_fallthru
      _
    // Predicated region
    $region10: #{forward.1} parent=1 // pred_check
      _
    $region11: #{forward.1} parent=1 // pred_check_branch
      %33 = sbr.rel (0) target = $region13
    $region12: #{forward.1} parent=1 // pred_region
      %34 = dma.done [#allocation3], 11904
    $region13: #{forward.1} parent=1 // pred_fallthru
      _
    // Predicated region
    $region14: #{forward.1} parent=1 // pred_check
      _
    $region15: #{forward.1} parent=1 // pred_check_branch
      %36 = sbr.rel (0) target = $region17
    $region16: #{forward.1} parent=1 // pred_region
      %37 = dma.done [#allocation6], 64
    $region17: #{forward.1} parent=1 // pred_fallthru
      _
    %v38 = vld [vmem:[#allocation5] sm:$0xf]
    %v39 = vld [vmem:[#allocation2] sm:$0xff]
    %v40 = vld [vmem:[#allocation2 + $0x8] sm:$0xff]
    %v41 = vld [vmem:[#allocation2 + $0x10] sm:$0xff]
    %v42 = vld [vmem:[#allocation2 + $0x18] sm:$0xff]
    %v43 = vld [vmem:[#allocation2 + $0x20] sm:$0xff]
    %v44 = vld [vmem:[#allocation2 + $0x28] sm:$0xff]
    %v45 = vld [vmem:[#allocation2 + $0x30] sm:$0xff]
    %v46 = vld [vmem:[#allocation2 + $0x38] sm:$0xff]
    %v47 = vld [vmem:[#allocation2 + $0x40] sm:$0xff]
    %v48 = vld [vmem:[#allocation2 + $0x48] sm:$0xff]
    %v49 = vld [vmem:[#allocation2 + $0x50] sm:$0xff]
    %v50 = vld [vmem:[#allocation2 + $0x58] sm:$0xff]
    %v51 = vld [vmem:[#allocation2 + $0x60] sm:$0xff]
    %v52 = vld [vmem:[#allocation2 + $0x68] sm:$0xff]
    %v53 = vld [vmem:[#allocation2 + $0x70] sm:$0xff]
    %v54 = vld [vmem:[#allocation2 + $0x78] sm:$0xff]
    %vm55 = vcmask 31744
    %v57 = vsel %vm55, %v39, 0
    %v60 = vsel %vm55, %v40, 0
    %v63 = vsel %vm55, %v41, 0
    %v66 = vsel %vm55, %v42, 0
    %v69 = vsel %vm55, %v43, 0
    %v72 = vsel %vm55, %v44, 0
    %v75 = vsel %vm55, %v45, 0
    %v78 = vsel %vm55, %v46, 0
    %v81 = vsel %vm55, %v47, 0
    %v84 = vsel %vm55, %v48, 0
    %v87 = vsel %vm55, %v49, 0
    %v90 = vsel %vm55, %v50, 0
    %v93 = vsel %vm55, %v51, 0
    %v96 = vsel %vm55, %v52, 0
    %v99 = vsel %vm55, %v53, 0
    %v102 = vsel %vm55, %v54, 0
    %vm104 = vcmask 1043456
    %v106 = vsel %vm104, %v38, 0
    %108 = vmatprep.subr.mxu0 0.0
    %109 = vmatpush1.msra.mxu0 0.0
    %110 = vmatprep.subr.mxu0 0.0
    %111 = vmatpush1.msra.mxu0 0.0
    %112 = vmatprep.subr.mxu0 0.0
    %113 = vmatpush1.msra.mxu0 0.0
    %114 = vmatprep.subr.mxu0 0.0
    %115 = vmatpush1.msra.mxu0 0.0
    %116 = vmatprep.subr.mxu0 0.0
    %117 = vmatpush1.msra.mxu0 0.0
    %118 = vmatprep.subr.mxu0 0.0
    %119 = vmatpush1.msra.mxu0 0.0
    %120 = vmatprep.subr.mxu0 0.0
    %121 = vmatpush1.msra.mxu0 0.0
    %122 = vmatprep.subr.mxu0 0.0
    %123 = vmatpush1.msra.mxu0 0.0
    %124 = vmatprep.subr.mxu0 0.0
    %125 = vmatpush1.msra.mxu0 0.0
    %126 = vmatprep.subr.mxu0 0.0
    %127 = vmatpush1.msra.mxu0 0.0
    %128 = vmatprep.subr.mxu0 0.0
    %129 = vmatpush1.msra.mxu0 0.0
    %130 = vmatprep.subr.mxu0 0.0
    %131 = vmatpush1.msra.mxu0 0.0
    %132 = vmatprep.subr.mxu0 0.0
    %133 = vmatpush1.msra.mxu0 0.0
    %134 = vmatprep.subr.mxu0 0.0
    %135 = vmatpush1.msra.mxu0 0.0
    %136 = vmatprep.subr.mxu0 0.0
    %137 = vmatpush1.msra.mxu0 0.0
    %138 = vmatprep.subr.mxu0 0.0
    %139 = vmatpush1.msra.mxu0 %v106
    %140 = vmatprep.subr.mxu0 0.0
    %141 = vmatpush2.msra.mxu0 0.0
    %142 = vmatprep.subr.mxu0 0.0
    %143 = vmatpush2.msra.mxu0 0.0
    %144 = vmatprep.subr.mxu0 0.0
    %145 = vmatpush2.msra.mxu0 0.0
    %146 = vmatprep.subr.mxu0 0.0
    %147 = vmatpush2.msra.mxu0 0.0
    %148 = vmatprep.subr.mxu0 0.0
    %149 = vmatpush2.msra.mxu0 0.0
    %150 = vmatprep.subr.mxu0 0.0
    %151 = vmatpush2.msra.mxu0 0.0
    %152 = vmatprep.subr.mxu0 0.0
    %153 = vmatpush2.msra.mxu0 0.0
    %154 = vmatprep.subr.mxu0 0.0
    %155 = vmatpush2.msra.mxu0 0.0
    %156 = vmatprep.subr.mxu0 0.0
    %157 = vmatpush2.msra.mxu0 0.0
    %158 = vmatprep.subr.mxu0 0.0
    %159 = vmatpush2.msra.mxu0 0.0
    %160 = vmatprep.subr.mxu0 0.0
    %161 = vmatpush2.msra.mxu0 0.0
    %162 = vmatprep.subr.mxu0 0.0
    %163 = vmatpush2.msra.mxu0 0.0
    %164 = vmatprep.subr.mxu0 0.0
    %165 = vmatpush2.msra.mxu0 0.0
    %166 = vmatprep.subr.mxu0 0.0
    %167 = vmatpush2.msra.mxu0 0.0
    %168 = vmatprep.subr.mxu0 0.0
    %169 = vmatpush2.msra.mxu0 0.0
    %170 = vmatprep.subr.mxu0 0.0
    %171 = vmatpush2.msra.mxu0 0.0
    %172 = vmatprep.mubr.f32.mxu0 0.0
    %173 = vmatmul.mubr.f32.gmra.mxu0 %v57
    %v174 = vpop.f32.mrf.mxu0
    %v175 = vadd.f32 0.0, %v174
    %v176 = vpop.f32.mrf.mxu0
    %177 = vmatprep.mubr.f32.mxu0 0.0
    %178 = vmatmul.mubr.f32.gmra.mxu0 %v60
    %v179 = vpop.f32.mrf.mxu0
    %v180 = vadd.f32 0.0, %v179
    %v181 = vpop.f32.mrf.mxu0
    %182 = vmatprep.mubr.f32.mxu0 0.0
    %183 = vmatmul.mubr.f32.gmra.mxu0 %v63
    %v184 = vpop.f32.mrf.mxu0
    %v185 = vadd.f32 0.0, %v184
    %v186 = vpop.f32.mrf.mxu0
    %187 = vmatprep.mubr.f32.mxu0 0.0
    %188 = vmatmul.mubr.f32.gmra.mxu0 %v66
    %v189 = vpop.f32.mrf.mxu0
    %v190 = vadd.f32 0.0, %v189
    %v191 = vpop.f32.mrf.mxu0
    %192 = vmatprep.mubr.f32.mxu0 0.0
    %193 = vmatmul.mubr.f32.gmra.mxu0 %v69
    %v194 = vpop.f32.mrf.mxu0
    %v195 = vadd.f32 0.0, %v194
    %v196 = vpop.f32.mrf.mxu0
    %197 = vmatprep.mubr.f32.mxu0 0.0
    %198 = vmatmul.mubr.f32.gmra.mxu0 %v72
    %v199 = vpop.f32.mrf.mxu0
    %v200 = vadd.f32 0.0, %v199
    %v201 = vpop.f32.mrf.mxu0
    %202 = vmatprep.mubr.f32.mxu0 0.0
    %203 = vmatmul.mubr.f32.gmra.mxu0 %v75
    %v204 = vpop.f32.mrf.mxu0
    %v205 = vadd.f32 0.0, %v204
    %v206 = vpop.f32.mrf.mxu0
    %207 = vmatprep.mubr.f32.mxu0 0.0
    %208 = vmatmul.mubr.f32.gmra.mxu0 %v78
    %v209 = vpop.f32.mrf.mxu0
    %v210 = vadd.f32 0.0, %v209
    %v211 = vpop.f32.mrf.mxu0
    %212 = vmatprep.mubr.f32.mxu0 0.0
    %213 = vmatmul.mubr.f32.gmra.mxu0 %v81
    %v214 = vpop.f32.mrf.mxu0
    %v215 = vadd.f32 0.0, %v214
    %v216 = vpop.f32.mrf.mxu0
    %217 = vmatprep.mubr.f32.mxu0 0.0
    %218 = vmatmul.mubr.f32.gmra.mxu0 %v84
    %v219 = vpop.f32.mrf.mxu0
    %v220 = vadd.f32 0.0, %v219
    %v221 = vpop.f32.mrf.mxu0
    %222 = vmatprep.mubr.f32.mxu0 0.0
    %223 = vmatmul.mubr.f32.gmra.mxu0 %v87
    %v224 = vpop.f32.mrf.mxu0
    %v225 = vadd.f32 0.0, %v224
    %v226 = vpop.f32.mrf.mxu0
    %227 = vmatprep.mubr.f32.mxu0 0.0
    %228 = vmatmul.mubr.f32.gmra.mxu0 %v90
    %v229 = vpop.f32.mrf.mxu0
    %v230 = vadd.f32 0.0, %v229
    %v231 = vpop.f32.mrf.mxu0
    %232 = vmatprep.mubr.f32.mxu0 0.0
    %233 = vmatmul.mubr.f32.gmra.mxu0 %v93
    %v234 = vpop.f32.mrf.mxu0
    %v235 = vadd.f32 0.0, %v234
    %v236 = vpop.f32.mrf.mxu0
    %237 = vmatprep.mubr.f32.mxu0 0.0
    %238 = vmatmul.mubr.f32.gmra.mxu0 %v96
    %v239 = vpop.f32.mrf.mxu0
    %v240 = vadd.f32 0.0, %v239
    %v241 = vpop.f32.mrf.mxu0
    %242 = vmatprep.mubr.f32.mxu0 0.0
    %243 = vmatmul.mubr.f32.gmra.mxu0 %v99
    %v244 = vpop.f32.mrf.mxu0
    %v245 = vadd.f32 0.0, %v244
    %v246 = vpop.f32.mrf.mxu0
    %247 = vmatprep.mubr.f32.mxu0 0.0
    %248 = vmatmul.mubr.f32.gmra.mxu0 %v102
    %v249 = vpop.f32.mrf.mxu0
    %v250 = vadd.f32 0.0, %v249
    %v251 = vpop.f32.mrf.mxu0
    %252 = vdwg.mxu0
    %v253 = vld [vmem:[#allocation2 + $0x80] sm:$0xff]
    %v254 = vld [vmem:[#allocation2 + $0x88] sm:$0xff]
    %v255 = vld [vmem:[#allocation2 + $0x90] sm:$0xff]
    %v256 = vld [vmem:[#allocation2 + $0x98] sm:$0xff]
    %v257 = vld [vmem:[#allocation2 + $0xa0] sm:$0xff]
    %v258 = vld [vmem:[#allocation2 + $0xa8] sm:$0xff]
    %v259 = vld [vmem:[#allocation2 + $0xb0] sm:$0xff]
    %v260 = vld [vmem:[#allocation2 + $0xb8] sm:$0xff]
    %v261 = vld [vmem:[#allocation2 + $0xc0] sm:$0xff]
    %v262 = vld [vmem:[#allocation2 + $0xc8] sm:$0xff]
    %v263 = vld [vmem:[#allocation2 + $0xd0] sm:$0xff]
    %v264 = vld [vmem:[#allocation2 + $0xd8] sm:$0xff]
    %v265 = vld [vmem:[#allocation2 + $0xe0] sm:$0xff]
    %v266 = vld [vmem:[#allocation2 + $0xe8] sm:$0xff]
    %v267 = vld [vmem:[#allocation2 + $0xf0] sm:$0xff]
    %v268 = vld [vmem:[#allocation2 + $0xf8] sm:$0xff]
    %v269 = vmul.f32 %v175, %v253
    %v270 = vmul.f32 %v180, %v254
    %v271 = vmul.f32 %v185, %v255
    %v272 = vmul.f32 %v190, %v256
    %v273 = vmul.f32 %v195, %v257
    %v274 = vmul.f32 %v200, %v258
    %v275 = vmul.f32 %v205, %v259
    %v276 = vmul.f32 %v210, %v260
    %v277 = vmul.f32 %v215, %v261
    %v278 = vmul.f32 %v220, %v262
    %v279 = vmul.f32 %v225, %v263
    %v280 = vmul.f32 %v230, %v264
    %v281 = vmul.f32 %v235, %v265
    %v282 = vmul.f32 %v240, %v266
    %v283 = vmul.f32 %v245, %v267
    %v284 = vmul.f32 %v250, %v268
    %vm285 = vcmask 326656
    %v286 = vsel %vm285, %v269, 0.0
    %287 = vadd.xlane.f32.xlu0 %v286
    %v288 = vpop.xlane.xlu0 %287
    %v289 = vsel %vm285, %v270, 0.0
    %290 = vadd.xlane.f32.xlu0 %v289
    %v291 = vpop.xlane.xlu0 %290
    %v292 = vsel %vm285, %v271, 0.0
    %293 = vadd.xlane.f32.xlu0 %v292
    %v294 = vpop.xlane.xlu0 %293
    %v295 = vsel %vm285, %v272, 0.0
    %296 = vadd.xlane.f32.xlu0 %v295
    %v297 = vpop.xlane.xlu0 %296
    %v298 = vsel %vm285, %v273, 0.0
    %299 = vadd.xlane.f32.xlu0 %v298
    %v300 = vpop.xlane.xlu0 %299
    %v301 = vsel %vm285, %v274, 0.0
    %302 = vadd.xlane.f32.xlu0 %v301
    %v303 = vpop.xlane.xlu0 %302
    %v304 = vsel %vm285, %v275, 0.0
    %305 = vadd.xlane.f32.xlu0 %v304
    %v306 = vpop.xlane.xlu0 %305
    %v307 = vsel %vm285, %v276, 0.0
    %308 = vadd.xlane.f32.xlu0 %v307
    %v309 = vpop.xlane.xlu0 %308
    %v310 = vsel %vm285, %v277, 0.0
    %311 = vadd.xlane.f32.xlu0 %v310
    %v312 = vpop.xlane.xlu0 %311
    %v313 = vsel %vm285, %v278, 0.0
    %314 = vadd.xlane.f32.xlu0 %v313
    %v315 = vpop.xlane.xlu0 %314
    %v316 = vsel %vm285, %v279, 0.0
    %317 = vadd.xlane.f32.xlu0 %v316
    %v318 = vpop.xlane.xlu0 %317
    %v319 = vsel %vm285, %v280, 0.0
    %320 = vadd.xlane.f32.xlu0 %v319
    %v321 = vpop.xlane.xlu0 %320
    %v322 = vsel %vm285, %v281, 0.0
    %323 = vadd.xlane.f32.xlu0 %v322
    %v324 = vpop.xlane.xlu0 %323
    %v325 = vsel %vm285, %v282, 0.0
    %326 = vadd.xlane.f32.xlu0 %v325
    %v327 = vpop.xlane.xlu0 %326
    %v328 = vsel %vm285, %v283, 0.0
    %329 = vadd.xlane.f32.xlu0 %v328
    %v330 = vpop.xlane.xlu0 %329
    %v331 = vsel %vm285, %v284, 0.0
    %332 = vadd.xlane.f32.xlu0 %v331
    %v333 = vpop.xlane.xlu0 %332
    %v334 = vld [vmem:[#allocation2 + $0x100] sm:$0xff]
    %v335 = vld [vmem:[#allocation2 + $0x108] sm:$0xff]
    %v336 = vld [vmem:[#allocation2 + $0x110] sm:$0xff]
    %v337 = vld [vmem:[#allocation2 + $0x118] sm:$0xff]
    %v338 = vld [vmem:[#allocation2 + $0x120] sm:$0xff]
    %v339 = vld [vmem:[#allocation2 + $0x128] sm:$0xff]
    %v340 = vld [vmem:[#allocation2 + $0x130] sm:$0xff]
    %v341 = vld [vmem:[#allocation2 + $0x138] sm:$0xff]
    %v342 = vld [vmem:[#allocation2 + $0x140] sm:$0xff]
    %v343 = vld [vmem:[#allocation2 + $0x148] sm:$0xff]
    %v344 = vld [vmem:[#allocation2 + $0x150] sm:$0xff]
    %v345 = vld [vmem:[#allocation2 + $0x158] sm:$0xff]
    %v346 = vld [vmem:[#allocation2 + $0x160] sm:$0xff]
    %v347 = vld [vmem:[#allocation2 + $0x168] sm:$0xff]
    %v348 = vld [vmem:[#allocation2 + $0x170] sm:$0xff]
    %v349 = vld [vmem:[#allocation2 + $0x178] sm:$0xff]
    %v350 = vld [vmem:[#allocation2 + $0x188] sm:$0x7]
    %v351 = vrot.slane %v288, 6
    %v352 = vrot.slane %v291, 6
    %v353 = vrot.slane %v294, 6
    %v354 = vrot.slane %v297, 6
    %v355 = vrot.slane %v300, 6
    %v356 = vrot.slane %v303, 6
    %v357 = vrot.slane %v306, 6
    %v358 = vrot.slane %v309, 6
    %v359 = vrot.slane %v312, 6
    %v360 = vrot.slane %v315, 6
    %v361 = vrot.slane %v318, 6
    %v362 = vrot.slane %v321, 6
    %v363 = vrot.slane %v324, 6
    %v364 = vrot.slane %v327, 6
    %v365 = vrot.slane %v330, 6
    %v366 = vrot.slane %v333, 6
    %v367 = vlaneseq
    %v368 = vshrl.u32 %v367, 7
    %vm369 = vcmp.lt.s32.totalorder %v368, 2
    %v370 = vsel %vm369, %v365, %v366
    %v371 = vsel %vm369, %v364, %v365
    %v372 = vsel %vm369, %v363, %v364
    %v373 = vsel %vm369, %v362, %v363
    %v374 = vsel %vm369, %v361, %v362
    %v375 = vsel %vm369, %v360, %v361
    %v376 = vsel %vm369, %v359, %v360
    %v377 = vsel %vm369, %v358, %v359
    %v378 = vsel %vm369, %v357, %v358
    %v379 = vsel %vm369, %v356, %v357
    %v380 = vsel %vm369, %v355, %v356
    %v381 = vsel %vm369, %v354, %v355
    %v382 = vsel %vm369, %v353, %v354
    %v383 = vsel %vm369, %v352, %v353
    %v384 = vsel %vm369, %v351, %v352
    %v385 = vsel %vm369, %v366, %v351
    %402 = vrot.lane.b32.xlu0 %v334, 127
    %v403 = vpop.permute.xlu0 %402
    %404 = vrot.lane.b32.xlu0 %v335, 127
    %v405 = vpop.permute.xlu0 %404
    %406 = vrot.lane.b32.xlu0 %v336, 127
    %v407 = vpop.permute.xlu0 %406
    %408 = vrot.lane.b32.xlu0 %v337, 127
    %v409 = vpop.permute.xlu0 %408
    %410 = vrot.lane.b32.xlu0 %v338, 127
    %v411 = vpop.permute.xlu0 %410
    %412 = vrot.lane.b32.xlu0 %v339, 127
    %v413 = vpop.permute.xlu0 %412
    %414 = vrot.lane.b32.xlu0 %v340, 127
    %v415 = vpop.permute.xlu0 %414
    %416 = vrot.lane.b32.xlu0 %v341, 127
    %v417 = vpop.permute.xlu0 %416
    %418 = vrot.lane.b32.xlu0 %v342, 127
    %v419 = vpop.permute.xlu0 %418
    %420 = vrot.lane.b32.xlu0 %v343, 127
    %v421 = vpop.permute.xlu0 %420
    %422 = vrot.lane.b32.xlu0 %v344, 127
    %v423 = vpop.permute.xlu0 %422
    %424 = vrot.lane.b32.xlu0 %v345, 127
    %v425 = vpop.permute.xlu0 %424
    %426 = vrot.lane.b32.xlu0 %v346, 127
    %v427 = vpop.permute.xlu0 %426
    %428 = vrot.lane.b32.xlu0 %v347, 127
    %v429 = vpop.permute.xlu0 %428
    %430 = vrot.lane.b32.xlu0 %v348, 127
    %v431 = vpop.permute.xlu0 %430
    %432 = vrot.lane.b32.xlu0 %v349, 127
    %v433 = vpop.permute.xlu0 %432
    %v450 = vmul.f32 %v385, %v403
    %v451 = vmul.f32 %v384, %v405
    %v452 = vmul.f32 %v383, %v407
    %v453 = vmul.f32 %v382, %v409
    %v454 = vmul.f32 %v381, %v411
    %v455 = vmul.f32 %v380, %v413
    %v456 = vmul.f32 %v379, %v415
    %v457 = vmul.f32 %v378, %v417
    %v458 = vmul.f32 %v377, %v419
    %v459 = vmul.f32 %v376, %v421
    %v460 = vmul.f32 %v375, %v423
    %v461 = vmul.f32 %v374, %v425
    %v462 = vmul.f32 %v373, %v427
    %v463 = vmul.f32 %v372, %v429
    %v464 = vmul.f32 %v371, %v431
    %v465 = vmul.f32 %v370, %v433
    %467 = vset.pattern.permute.xlu0 0
    %468 = vperm.xlu0 %467, %v450
    %v469 = vpop.permute.xlu0 %468
    %472 = vset.pattern.permute.xlu0 0
    %473 = vperm.xlu0 %472, %v451
    %v474 = vpop.permute.xlu0 %473
    %477 = vset.pattern.permute.xlu0 0
    %478 = vperm.xlu0 %477, %v452
    %v479 = vpop.permute.xlu0 %478
    %482 = vset.pattern.permute.xlu0 0
    %483 = vperm.xlu0 %482, %v453
    %v484 = vpop.permute.xlu0 %483
    %487 = vset.pattern.permute.xlu0 0
    %488 = vperm.xlu0 %487, %v454
    %v489 = vpop.permute.xlu0 %488
    %492 = vset.pattern.permute.xlu0 0
    %493 = vperm.xlu0 %492, %v455
    %v494 = vpop.permute.xlu0 %493
    %497 = vset.pattern.permute.xlu0 0
    %498 = vperm.xlu0 %497, %v456
    %v499 = vpop.permute.xlu0 %498
    %502 = vset.pattern.permute.xlu0 0
    %503 = vperm.xlu0 %502, %v457
    %v504 = vpop.permute.xlu0 %503
    %507 = vset.pattern.permute.xlu0 0
    %508 = vperm.xlu0 %507, %v458
    %v509 = vpop.permute.xlu0 %508
    %512 = vset.pattern.permute.xlu0 0
    %513 = vperm.xlu0 %512, %v459
    %v514 = vpop.permute.xlu0 %513
    %517 = vset.pattern.permute.xlu0 0
    %518 = vperm.xlu0 %517, %v460
    %v519 = vpop.permute.xlu0 %518
    %522 = vset.pattern.permute.xlu0 0
    %523 = vperm.xlu0 %522, %v461
    %v524 = vpop.permute.xlu0 %523
    %527 = vset.pattern.permute.xlu0 0
    %528 = vperm.xlu0 %527, %v462
    %v529 = vpop.permute.xlu0 %528
    %532 = vset.pattern.permute.xlu0 0
    %533 = vperm.xlu0 %532, %v463
    %v534 = vpop.permute.xlu0 %533
    %537 = vset.pattern.permute.xlu0 0
    %538 = vperm.xlu0 %537, %v464
    %v539 = vpop.permute.xlu0 %538
    %542 = vset.pattern.permute.xlu0 0
    %543 = vperm.xlu0 %542, %v465
    %v544 = vpop.permute.xlu0 %543
    %v546 = vlaneseq
    %v547 = vshrl.u32 %v546, 7
    %v548 = vsub.s32 0, %v547
    %v549 = vrot.slane %v350, %v548
    %v550 = vmul.f32 %v469, %v549
    %v551 = vmul.f32 %v474, %v549
    %v552 = vmul.f32 %v479, %v549
    %v553 = vmul.f32 %v484, %v549
    %v554 = vmul.f32 %v489, %v549
    %v555 = vmul.f32 %v494, %v549
    %v556 = vmul.f32 %v499, %v549
    %v557 = vmul.f32 %v504, %v549
    %v558 = vmul.f32 %v509, %v549
    %v559 = vmul.f32 %v514, %v549
    %v560 = vmul.f32 %v519, %v549
    %v561 = vmul.f32 %v524, %v549
    %v562 = vmul.f32 %v529, %v549
    %v563 = vmul.f32 %v534, %v549
    %v564 = vmul.f32 %v539, %v549
    %v565 = vmul.f32 %v544, %v549
    %v566 = vrot.slane %v288, 7
    %v567 = vrot.slane %v291, 7
    %v568 = vrot.slane %v294, 7
    %v569 = vrot.slane %v297, 7
    %v570 = vrot.slane %v300, 7
    %v571 = vrot.slane %v303, 7
    %v572 = vrot.slane %v306, 7
    %v573 = vrot.slane %v309, 7
    %v574 = vrot.slane %v312, 7
    %v575 = vrot.slane %v315, 7
    %v576 = vrot.slane %v318, 7
    %v577 = vrot.slane %v321, 7
    %v578 = vrot.slane %v324, 7
    %v579 = vrot.slane %v327, 7
    %v580 = vrot.slane %v330, 7
    %v581 = vrot.slane %v333, 7
    %vm582 = vcmp.lt.s32.totalorder %v368, 1
    %v583 = vsel %vm582, %v580, %v581
    %v584 = vsel %vm582, %v579, %v580
    %v585 = vsel %vm582, %v578, %v579
    %v586 = vsel %vm582, %v577, %v578
    %v587 = vsel %vm582, %v576, %v577
    %v588 = vsel %vm582, %v575, %v576
    %v589 = vsel %vm582, %v574, %v575
    %v590 = vsel %vm582, %v573, %v574
    %v591 = vsel %vm582, %v572, %v573
    %v592 = vsel %vm582, %v571, %v572
    %v593 = vsel %vm582, %v570, %v571
    %v594 = vsel %vm582, %v569, %v570
    %v595 = vsel %vm582, %v568, %v569
    %v596 = vsel %vm582, %v567, %v568
    %v597 = vsel %vm582, %v566, %v567
    %v598 = vsel %vm582, %v581, %v566
    %v599 = vmul.f32 %v598, %v334
    %v600 = vmul.f32 %v597, %v335
    %v601 = vmul.f32 %v596, %v336
    %v602 = vmul.f32 %v595, %v337
    %v603 = vmul.f32 %v594, %v338
    %v604 = vmul.f32 %v593, %v339
    %v605 = vmul.f32 %v592, %v340
    %v606 = vmul.f32 %v591, %v341
    %v607 = vmul.f32 %v590, %v342
    %v608 = vmul.f32 %v589, %v343
    %v609 = vmul.f32 %v588, %v344
    %v610 = vmul.f32 %v587, %v345
    %v611 = vmul.f32 %v586, %v346
    %v612 = vmul.f32 %v585, %v347
    %v613 = vmul.f32 %v584, %v348
    %v614 = vmul.f32 %v583, %v349
    %616 = vset.pattern.permute.xlu0 0
    %617 = vperm.xlu0 %616, %v599
    %v618 = vpop.permute.xlu0 %617
    %621 = vset.pattern.permute.xlu0 0
    %622 = vperm.xlu0 %621, %v600
    %v623 = vpop.permute.xlu0 %622
    %626 = vset.pattern.permute.xlu0 0
    %627 = vperm.xlu0 %626, %v601
    %v628 = vpop.permute.xlu0 %627
    %631 = vset.pattern.permute.xlu0 0
    %632 = vperm.xlu0 %631, %v602
    %v633 = vpop.permute.xlu0 %632
    %636 = vset.pattern.permute.xlu0 0
    %637 = vperm.xlu0 %636, %v603
    %v638 = vpop.permute.xlu0 %637
    %641 = vset.pattern.permute.xlu0 0
    %642 = vperm.xlu0 %641, %v604
    %v643 = vpop.permute.xlu0 %642
    %646 = vset.pattern.permute.xlu0 0
    %647 = vperm.xlu0 %646, %v605
    %v648 = vpop.permute.xlu0 %647
    %651 = vset.pattern.permute.xlu0 0
    %652 = vperm.xlu0 %651, %v606
    %v653 = vpop.permute.xlu0 %652
    %656 = vset.pattern.permute.xlu0 0
    %657 = vperm.xlu0 %656, %v607
    %v658 = vpop.permute.xlu0 %657
    %661 = vset.pattern.permute.xlu0 0
    %662 = vperm.xlu0 %661, %v608
    %v663 = vpop.permute.xlu0 %662
    %666 = vset.pattern.permute.xlu0 0
    %667 = vperm.xlu0 %666, %v609
    %v668 = vpop.permute.xlu0 %667
    %671 = vset.pattern.permute.xlu0 0
    %672 = vperm.xlu0 %671, %v610
    %v673 = vpop.permute.xlu0 %672
    %676 = vset.pattern.permute.xlu0 0
    %677 = vperm.xlu0 %676, %v611
    %v678 = vpop.permute.xlu0 %677
    %681 = vset.pattern.permute.xlu0 0
    %682 = vperm.xlu0 %681, %v612
    %v683 = vpop.permute.xlu0 %682
    %686 = vset.pattern.permute.xlu0 0
    %687 = vperm.xlu0 %686, %v613
    %v688 = vpop.permute.xlu0 %687
    %691 = vset.pattern.permute.xlu0 0
    %692 = vperm.xlu0 %691, %v614
    %v693 = vpop.permute.xlu0 %692
    %v695 = vlaneseq
    %v696 = vshrl.u32 %v695, 7
    %v697 = vsub.s32 1, %v696
    %v698 = vrot.slane %v350, %v697
    %v699 = vmul.f32 %v618, %v698
    %v700 = vmul.f32 %v623, %v698
    %v701 = vmul.f32 %v628, %v698
    %v702 = vmul.f32 %v633, %v698
    %v703 = vmul.f32 %v638, %v698
    %v704 = vmul.f32 %v643, %v698
    %v705 = vmul.f32 %v648, %v698
    %v706 = vmul.f32 %v653, %v698
    %v707 = vmul.f32 %v658, %v698
    %v708 = vmul.f32 %v663, %v698
    %v709 = vmul.f32 %v668, %v698
    %v710 = vmul.f32 %v673, %v698
    %v711 = vmul.f32 %v678, %v698
    %v712 = vmul.f32 %v683, %v698
    %v713 = vmul.f32 %v688, %v698
    %v714 = vmul.f32 %v693, %v698
    %v715 = vadd.f32 %v550, %v699
    %v716 = vadd.f32 %v551, %v700
    %v717 = vadd.f32 %v552, %v701
    %v718 = vadd.f32 %v553, %v702
    %v719 = vadd.f32 %v554, %v703
    %v720 = vadd.f32 %v555, %v704
    %v721 = vadd.f32 %v556, %v705
    %v722 = vadd.f32 %v557, %v706
    %v723 = vadd.f32 %v558, %v707
    %v724 = vadd.f32 %v559, %v708
    %v725 = vadd.f32 %v560, %v709
    %v726 = vadd.f32 %v561, %v710
    %v727 = vadd.f32 %v562, %v711
    %v728 = vadd.f32 %v563, %v712
    %v729 = vadd.f32 %v564, %v713
    %v730 = vadd.f32 %v565, %v714
    %v731 = vlaneseq
    %v732 = vshrl.u32 %v731, 7
    %v733 = vsub.s32 2, %v732
    %v734 = vrot.slane %v350, %v733
    %v735 = vmul.f32 %v288, %v734
    %v736 = vmul.f32 %v291, %v734
    %v737 = vmul.f32 %v294, %v734
    %v738 = vmul.f32 %v297, %v734
    %v739 = vmul.f32 %v300, %v734
    %v740 = vmul.f32 %v303, %v734
    %v741 = vmul.f32 %v306, %v734
    %v742 = vmul.f32 %v309, %v734
    %v743 = vmul.f32 %v312, %v734
    %v744 = vmul.f32 %v315, %v734
    %v745 = vmul.f32 %v318, %v734
    %v746 = vmul.f32 %v321, %v734
    %v747 = vmul.f32 %v324, %v734
    %v748 = vmul.f32 %v327, %v734
    %v749 = vmul.f32 %v330, %v734
    %v750 = vmul.f32 %v333, %v734
    %v751 = vadd.f32 %v715, %v735
    %v752 = vadd.f32 %v716, %v736
    %v753 = vadd.f32 %v717, %v737
    %v754 = vadd.f32 %v718, %v738
    %v755 = vadd.f32 %v719, %v739
    %v756 = vadd.f32 %v720, %v740
    %v757 = vadd.f32 %v721, %v741
    %v758 = vadd.f32 %v722, %v742
    %v759 = vadd.f32 %v723, %v743
    %v760 = vadd.f32 %v724, %v744
    %v761 = vadd.f32 %v725, %v745
    %v762 = vadd.f32 %v726, %v746
    %v763 = vadd.f32 %v727, %v747
    %v764 = vadd.f32 %v728, %v748
    %v765 = vadd.f32 %v729, %v749
    %v766 = vadd.f32 %v730, %v750
    %v767 = vld [vmem:[#allocation2 + $0x190] sm:$0x1]
    %v768 = vlaneseq
    %v769 = vshrl.u32 %v768, 7
    %v770 = vsub.s32 0, %v769
    %v771 = vrot.slane %v767, %v770
    %v772 = vadd.f32 %v751, %v771
    %v773 = vadd.f32 %v752, %v771
    %v774 = vadd.f32 %v753, %v771
    %v775 = vadd.f32 %v754, %v771
    %v776 = vadd.f32 %v755, %v771
    %v777 = vadd.f32 %v756, %v771
    %v778 = vadd.f32 %v757, %v771
    %v779 = vadd.f32 %v758, %v771
    %v780 = vadd.f32 %v759, %v771
    %v781 = vadd.f32 %v760, %v771
    %v782 = vadd.f32 %v761, %v771
    %v783 = vadd.f32 %v762, %v771
    %v784 = vadd.f32 %v763, %v771
    %v785 = vadd.f32 %v764, %v771
    %v786 = vadd.f32 %v765, %v771
    %v787 = vadd.f32 %v766, %v771
    %v788 = vmax.f32 %v772, 0.0
    %v789 = vmax.f32 %v773, 0.0
    %v790 = vmax.f32 %v774, 0.0
    %v791 = vmax.f32 %v775, 0.0
    %v792 = vmax.f32 %v776, 0.0
    %v793 = vmax.f32 %v777, 0.0
    %v794 = vmax.f32 %v778, 0.0
    %v795 = vmax.f32 %v779, 0.0
    %v796 = vmax.f32 %v780, 0.0
    %v797 = vmax.f32 %v781, 0.0
    %v798 = vmax.f32 %v782, 0.0
    %v799 = vmax.f32 %v783, 0.0
    %v800 = vmax.f32 %v784, 0.0
    %v801 = vmax.f32 %v785, 0.0
    %v802 = vmax.f32 %v786, 0.0
    %v803 = vmax.f32 %v787, 0.0
    %v804 = vld [vmem:[#allocation2 + $0x198] sm:$0xff]
    %v805 = vld [vmem:[#allocation2 + $0x1a0] sm:$0xff]
    %v806 = vld [vmem:[#allocation2 + $0x1a8] sm:$0xff]
    %v807 = vld [vmem:[#allocation2 + $0x1b0] sm:$0xff]
    %v808 = vld [vmem:[#allocation2 + $0x1b8] sm:$0xff]
    %v809 = vld [vmem:[#allocation2 + $0x1c0] sm:$0xff]
    %v810 = vrot.slane %v788, 6
    %v811 = vrot.slane %v789, 6
    %v812 = vrot.slane %v790, 6
    %v813 = vrot.slane %v791, 6
    %v814 = vrot.slane %v792, 6
    %v815 = vrot.slane %v793, 6
    %v816 = vrot.slane %v794, 6
    %v817 = vrot.slane %v795, 6
    %v818 = vrot.slane %v796, 6
    %v819 = vrot.slane %v797, 6
    %v820 = vrot.slane %v798, 6
    %v821 = vrot.slane %v799, 6
    %v822 = vrot.slane %v800, 6
    %v823 = vrot.slane %v801, 6
    %v824 = vrot.slane %v802, 6
    %v825 = vrot.slane %v803, 6
    %v826 = vsel %vm369, %v824, %v825
    %v827 = vsel %vm369, %v823, %v824
    %v828 = vsel %vm369, %v822, %v823
    %v829 = vsel %vm369, %v821, %v822
    %v830 = vsel %vm369, %v820, %v821
    %v831 = vsel %vm369, %v819, %v820
    %v832 = vsel %vm369, %v818, %v819
    %v833 = vsel %vm369, %v817, %v818
    %v834 = vsel %vm369, %v816, %v817
    %v835 = vsel %vm369, %v815, %v816
    %v836 = vsel %vm369, %v814, %v815
    %v837 = vsel %vm369, %v813, %v814
    %v838 = vsel %vm369, %v812, %v813
    %v839 = vsel %vm369, %v811, %v812
    %v840 = vsel %vm369, %v810, %v811
    %v841 = vsel %vm369, %v825, %v810
    %842 = vset.pattern.permute.xlu0 1
    %843 = vperm.xlu0 %842, %v334
    %v844 = vpop.permute.xlu0 %843
    %846 = vset.pattern.permute.xlu0 1
    %847 = vperm.xlu0 %846, %v335
    %v848 = vpop.permute.xlu0 %847
    %850 = vset.pattern.permute.xlu0 1
    %851 = vperm.xlu0 %850, %v336
    %v852 = vpop.permute.xlu0 %851
    %854 = vset.pattern.permute.xlu0 1
    %855 = vperm.xlu0 %854, %v337
    %v856 = vpop.permute.xlu0 %855
    %858 = vset.pattern.permute.xlu0 1
    %859 = vperm.xlu0 %858, %v338
    %v860 = vpop.permute.xlu0 %859
    %862 = vset.pattern.permute.xlu0 1
    %863 = vperm.xlu0 %862, %v339
    %v864 = vpop.permute.xlu0 %863
    %866 = vset.pattern.permute.xlu0 1
    %867 = vperm.xlu0 %866, %v340
    %v868 = vpop.permute.xlu0 %867
    %870 = vset.pattern.permute.xlu0 1
    %871 = vperm.xlu0 %870, %v341
    %v872 = vpop.permute.xlu0 %871
    %874 = vset.pattern.permute.xlu0 1
    %875 = vperm.xlu0 %874, %v342
    %v876 = vpop.permute.xlu0 %875
    %878 = vset.pattern.permute.xlu0 1
    %879 = vperm.xlu0 %878, %v343
    %v880 = vpop.permute.xlu0 %879
    %882 = vset.pattern.permute.xlu0 1
    %883 = vperm.xlu0 %882, %v344
    %v884 = vpop.permute.xlu0 %883
    %886 = vset.pattern.permute.xlu0 1
    %887 = vperm.xlu0 %886, %v345
    %v888 = vpop.permute.xlu0 %887
    %890 = vset.pattern.permute.xlu0 1
    %891 = vperm.xlu0 %890, %v346
    %v892 = vpop.permute.xlu0 %891
    %894 = vset.pattern.permute.xlu0 1
    %895 = vperm.xlu0 %894, %v347
    %v896 = vpop.permute.xlu0 %895
    %898 = vset.pattern.permute.xlu0 1
    %899 = vperm.xlu0 %898, %v348
    %v900 = vpop.permute.xlu0 %899
    %902 = vset.pattern.permute.xlu0 1
    %903 = vperm.xlu0 %902, %v349
    %v904 = vpop.permute.xlu0 %903
    %v906 = vmul.f32 %v841, %v844
    %v907 = vmul.f32 %v840, %v848
    %v908 = vmul.f32 %v839, %v852
    %v909 = vmul.f32 %v838, %v856
    %v910 = vmul.f32 %v837, %v860
    %v911 = vmul.f32 %v836, %v864
    %v912 = vmul.f32 %v835, %v868
    %v913 = vmul.f32 %v834, %v872
    %v914 = vmul.f32 %v833, %v876
    %v915 = vmul.f32 %v832, %v880
    %v916 = vmul.f32 %v831, %v884
    %v917 = vmul.f32 %v830, %v888
    %v918 = vmul.f32 %v829, %v892
    %v919 = vmul.f32 %v828, %v896
    %v920 = vmul.f32 %v827, %v900
    %v921 = vmul.f32 %v826, %v904
    %v922 = vrot.slane %v788, 7
    %v923 = vrot.slane %v789, 7
    %v924 = vrot.slane %v790, 7
    %v925 = vrot.slane %v791, 7
    %v926 = vrot.slane %v792, 7
    %v927 = vrot.slane %v793, 7
    %v928 = vrot.slane %v794, 7
    %v929 = vrot.slane %v795, 7
    %v930 = vrot.slane %v796, 7
    %v931 = vrot.slane %v797, 7
    %v932 = vrot.slane %v798, 7
    %v933 = vrot.slane %v799, 7
    %v934 = vrot.slane %v800, 7
    %v935 = vrot.slane %v801, 7
    %v936 = vrot.slane %v802, 7
    %v937 = vrot.slane %v803, 7
    %v938 = vsel %vm582, %v936, %v937
    %v939 = vsel %vm582, %v935, %v936
    %v940 = vsel %vm582, %v934, %v935
    %v941 = vsel %vm582, %v933, %v934
    %v942 = vsel %vm582, %v932, %v933
    %v943 = vsel %vm582, %v931, %v932
    %v944 = vsel %vm582, %v930, %v931
    %v945 = vsel %vm582, %v929, %v930
    %v946 = vsel %vm582, %v928, %v929
    %v947 = vsel %vm582, %v927, %v928
    %v948 = vsel %vm582, %v926, %v927
    %v949 = vsel %vm582, %v925, %v926
    %v950 = vsel %vm582, %v924, %v925
    %v951 = vsel %vm582, %v923, %v924
    %v952 = vsel %vm582, %v922, %v923
    %v953 = vsel %vm582, %v937, %v922
    %954 = vset.pattern.permute.xlu0 0
    %955 = vperm.xlu0 %954, %v334
    %v956 = vpop.permute.xlu0 %955
    %958 = vset.pattern.permute.xlu0 0
    %959 = vperm.xlu0 %958, %v335
    %v960 = vpop.permute.xlu0 %959
    %962 = vset.pattern.permute.xlu0 0
    %963 = vperm.xlu0 %962, %v336
    %v964 = vpop.permute.xlu0 %963
    %966 = vset.pattern.permute.xlu0 0
    %967 = vperm.xlu0 %966, %v337
    %v968 = vpop.permute.xlu0 %967
    %970 = vset.pattern.permute.xlu0 0
    %971 = vperm.xlu0 %970, %v338
    %v972 = vpop.permute.xlu0 %971
    %974 = vset.pattern.permute.xlu0 0
    %975 = vperm.xlu0 %974, %v339
    %v976 = vpop.permute.xlu0 %975
    %978 = vset.pattern.permute.xlu0 0
    %979 = vperm.xlu0 %978, %v340
    %v980 = vpop.permute.xlu0 %979
    %982 = vset.pattern.permute.xlu0 0
    %983 = vperm.xlu0 %982, %v341
    %v984 = vpop.permute.xlu0 %983
    %986 = vset.pattern.permute.xlu0 0
    %987 = vperm.xlu0 %986, %v342
    %v988 = vpop.permute.xlu0 %987
    %990 = vset.pattern.permute.xlu0 0
    %991 = vperm.xlu0 %990, %v343
    %v992 = vpop.permute.xlu0 %991
    %994 = vset.pattern.permute.xlu0 0
    %995 = vperm.xlu0 %994, %v344
    %v996 = vpop.permute.xlu0 %995
    %998 = vset.pattern.permute.xlu0 0
    %999 = vperm.xlu0 %998, %v345
    %v1000 = vpop.permute.xlu0 %999
    %1002 = vset.pattern.permute.xlu0 0
    %1003 = vperm.xlu0 %1002, %v346
    %v1004 = vpop.permute.xlu0 %1003
    %1006 = vset.pattern.permute.xlu0 0
    %1007 = vperm.xlu0 %1006, %v347
    %v1008 = vpop.permute.xlu0 %1007
    %1010 = vset.pattern.permute.xlu0 0
    %1011 = vperm.xlu0 %1010, %v348
    %v1012 = vpop.permute.xlu0 %1011
    %1014 = vset.pattern.permute.xlu0 0
    %1015 = vperm.xlu0 %1014, %v349
    %v1016 = vpop.permute.xlu0 %1015
    %v1018 = vmul.f32 %v953, %v956
    %v1019 = vmul.f32 %v952, %v960
    %v1020 = vmul.f32 %v951, %v964
    %v1021 = vmul.f32 %v950, %v968
    %v1022 = vmul.f32 %v949, %v972
    %v1023 = vmul.f32 %v948, %v976
    %v1024 = vmul.f32 %v947, %v980
    %v1025 = vmul.f32 %v946, %v984
    %v1026 = vmul.f32 %v945, %v988
    %v1027 = vmul.f32 %v944, %v992
    %v1028 = vmul.f32 %v943, %v996
    %v1029 = vmul.f32 %v942, %v1000
    %v1030 = vmul.f32 %v941, %v1004
    %v1031 = vmul.f32 %v940, %v1008
    %v1032 = vmul.f32 %v939, %v1012
    %v1033 = vmul.f32 %v938, %v1016
    %1050 = vrot.lane.b32.xlu0 %v1018, 16
    %v1051 = vpop.permute.xlu0 %1050
    %1052 = vrot.lane.b32.xlu0 %v1019, 16
    %v1053 = vpop.permute.xlu0 %1052
    %1054 = vrot.lane.b32.xlu0 %v1020, 16
    %v1055 = vpop.permute.xlu0 %1054
    %1056 = vrot.lane.b32.xlu0 %v1021, 16
    %v1057 = vpop.permute.xlu0 %1056
    %1058 = vrot.lane.b32.xlu0 %v1022, 16
    %v1059 = vpop.permute.xlu0 %1058
    %1060 = vrot.lane.b32.xlu0 %v1023, 16
    %v1061 = vpop.permute.xlu0 %1060
    %1062 = vrot.lane.b32.xlu0 %v1024, 16
    %v1063 = vpop.permute.xlu0 %1062
    %1064 = vrot.lane.b32.xlu0 %v1025, 16
    %v1065 = vpop.permute.xlu0 %1064
    %1066 = vrot.lane.b32.xlu0 %v1026, 16
    %v1067 = vpop.permute.xlu0 %1066
    %1068 = vrot.lane.b32.xlu0 %v1027, 16
    %v1069 = vpop.permute.xlu0 %1068
    %1070 = vrot.lane.b32.xlu0 %v1028, 16
    %v1071 = vpop.permute.xlu0 %1070
    %1072 = vrot.lane.b32.xlu0 %v1029, 16
    %v1073 = vpop.permute.xlu0 %1072
    %1074 = vrot.lane.b32.xlu0 %v1030, 16
    %v1075 = vpop.permute.xlu0 %1074
    %1076 = vrot.lane.b32.xlu0 %v1031, 16
    %v1077 = vpop.permute.xlu0 %1076
    %1078 = vrot.lane.b32.xlu0 %v1032, 16
    %v1079 = vpop.permute.xlu0 %1078
    %1080 = vrot.lane.b32.xlu0 %v1033, 16
    %v1081 = vpop.permute.xlu0 %1080
    %1114 = vrot.lane.b32.xlu0 %v788, 32
    %v1115 = vpop.permute.xlu0 %1114
    %1116 = vrot.lane.b32.xlu0 %v789, 32
    %v1117 = vpop.permute.xlu0 %1116
    %1118 = vrot.lane.b32.xlu0 %v790, 32
    %v1119 = vpop.permute.xlu0 %1118
    %1120 = vrot.lane.b32.xlu0 %v791, 32
    %v1121 = vpop.permute.xlu0 %1120
    %1122 = vrot.lane.b32.xlu0 %v792, 32
    %v1123 = vpop.permute.xlu0 %1122
    %1124 = vrot.lane.b32.xlu0 %v793, 32
    %v1125 = vpop.permute.xlu0 %1124
    %1126 = vrot.lane.b32.xlu0 %v794, 32
    %v1127 = vpop.permute.xlu0 %1126
    %1128 = vrot.lane.b32.xlu0 %v795, 32
    %v1129 = vpop.permute.xlu0 %1128
    %1130 = vrot.lane.b32.xlu0 %v796, 32
    %v1131 = vpop.permute.xlu0 %1130
    %1132 = vrot.lane.b32.xlu0 %v797, 32
    %v1133 = vpop.permute.xlu0 %1132
    %1134 = vrot.lane.b32.xlu0 %v798, 32
    %v1135 = vpop.permute.xlu0 %1134
    %1136 = vrot.lane.b32.xlu0 %v799, 32
    %v1137 = vpop.permute.xlu0 %1136
    %1138 = vrot.lane.b32.xlu0 %v800, 32
    %v1139 = vpop.permute.xlu0 %1138
    %1140 = vrot.lane.b32.xlu0 %v801, 32
    %v1141 = vpop.permute.xlu0 %1140
    %1142 = vrot.lane.b32.xlu0 %v802, 32
    %v1143 = vpop.permute.xlu0 %1142
    %1144 = vrot.lane.b32.xlu0 %v803, 32
    %v1145 = vpop.permute.xlu0 %1144
    %vm1162 = vcmask 130048
    %v1163 = vsel %vm1162, %v906, %v1051
    %v1164 = vsel %vm1162, %v907, %v1053
    %v1165 = vsel %vm1162, %v908, %v1055
    %v1166 = vsel %vm1162, %v909, %v1057
    %v1167 = vsel %vm1162, %v910, %v1059
    %v1168 = vsel %vm1162, %v911, %v1061
    %v1169 = vsel %vm1162, %v912, %v1063
    %v1170 = vsel %vm1162, %v913, %v1065
    %v1171 = vsel %vm1162, %v914, %v1067
    %v1172 = vsel %vm1162, %v915, %v1069
    %v1173 = vsel %vm1162, %v916, %v1071
    %v1174 = vsel %vm1162, %v917, %v1073
    %v1175 = vsel %vm1162, %v918, %v1075
    %v1176 = vsel %vm1162, %v919, %v1077
    %v1177 = vsel %vm1162, %v920, %v1079
    %v1178 = vsel %vm1162, %v921, %v1081
    %vm1179 = vcmask 261120
    %v1180 = vsel %vm1179, %v1163, %v1115
    %v1181 = vsel %vm1179, %v1164, %v1117
    %v1182 = vsel %vm1179, %v1165, %v1119
    %v1183 = vsel %vm1179, %v1166, %v1121
    %v1184 = vsel %vm1179, %v1167, %v1123
    %v1185 = vsel %vm1179, %v1168, %v1125
    %v1186 = vsel %vm1179, %v1169, %v1127
    %v1187 = vsel %vm1179, %v1170, %v1129
    %v1188 = vsel %vm1179, %v1171, %v1131
    %v1189 = vsel %vm1179, %v1172, %v1133
    %v1190 = vsel %vm1179, %v1173, %v1135
    %v1191 = vsel %vm1179, %v1174, %v1137
    %v1192 = vsel %vm1179, %v1175, %v1139
    %v1193 = vsel %vm1179, %v1176, %v1141
    %v1194 = vsel %vm1179, %v1177, %v1143
    %v1195 = vsel %vm1179, %v1178, %v1145
    %v1196 = vld [vmem:[#allocation2 + $0x1c8] sm:$0x1]
    %v1197 = vlaneseq
    %v1198 = vshrl.u32 %v1197, 7
    %v1199 = vsub.s32 0, %v1198
    %v1200 = vrot.slane %v1196, %v1199
    %vm1201 = vcmask 392192
    %v1203 = vsel %vm1201, %v1180, 0
    %v1206 = vsel %vm1201, %v1181, 0
    %v1209 = vsel %vm1201, %v1182, 0
    %v1212 = vsel %vm1201, %v1183, 0
    %v1215 = vsel %vm1201, %v1184, 0
    %v1218 = vsel %vm1201, %v1185, 0
    %v1221 = vsel %vm1201, %v1186, 0
    %v1224 = vsel %vm1201, %v1187, 0
    %v1227 = vsel %vm1201, %v1188, 0
    %v1230 = vsel %vm1201, %v1189, 0
    %v1233 = vsel %vm1201, %v1190, 0
    %v1236 = vsel %vm1201, %v1191, 0
    %v1239 = vsel %vm1201, %v1192, 0
    %v1242 = vsel %vm1201, %v1193, 0
    %v1245 = vsel %vm1201, %v1194, 0
    %v1248 = vsel %vm1201, %v1195, 0
    %1250 = vmatprep.subr.mxu0 0.0
    %1251 = vmatpush1.msra.mxu0 0.0
    %1252 = vmatprep.subr.mxu0 0.0
    %1253 = vmatpush1.msra.mxu0 0.0
    %1254 = vmatprep.subr.mxu0 0.0
    %1255 = vmatpush1.msra.mxu0 0.0
    %1256 = vmatprep.subr.mxu0 0.0
    %1257 = vmatpush1.msra.mxu0 0.0
    %1258 = vmatprep.subr.mxu0 0.0
    %1259 = vmatpush1.msra.mxu0 0.0
    %1260 = vmatprep.subr.mxu0 0.0
    %1261 = vmatpush1.msra.mxu0 0.0
    %1262 = vmatprep.subr.mxu0 0.0
    %1263 = vmatpush1.msra.mxu0 0.0
    %1264 = vmatprep.subr.mxu0 0.0
    %1265 = vmatpush1.msra.mxu0 0.0
    %1266 = vmatprep.subr.mxu0 0.0
    %1267 = vmatpush1.msra.mxu0 0.0
    %1268 = vmatprep.subr.mxu0 0.0
    %1269 = vmatpush1.msra.mxu0 0.0
    %1270 = vmatprep.subr.mxu0 0.0
    %1271 = vmatpush1.msra.mxu0 %v809
    %1272 = vmatprep.subr.mxu0 0.0
    %1273 = vmatpush1.msra.mxu0 %v808
    %1274 = vmatprep.subr.mxu0 0.0
    %1275 = vmatpush1.msra.mxu0 %v807
    %1276 = vmatprep.subr.mxu0 0.0
    %1277 = vmatpush1.msra.mxu0 %v806
    %1278 = vmatprep.subr.mxu0 0.0
    %1279 = vmatpush1.msra.mxu0 %v805
    %1280 = vmatprep.subr.mxu0 0.0
    %1281 = vmatpush1.msra.mxu0 %v804
    %1282 = vmatprep.subr.mxu0 0.0
    %1283 = vmatpush2.msra.mxu0 0.0
    %1284 = vmatprep.subr.mxu0 0.0
    %1285 = vmatpush2.msra.mxu0 0.0
    %1286 = vmatprep.subr.mxu0 0.0
    %1287 = vmatpush2.msra.mxu0 0.0
    %1288 = vmatprep.subr.mxu0 0.0
    %1289 = vmatpush2.msra.mxu0 0.0
    %1290 = vmatprep.subr.mxu0 0.0
    %1291 = vmatpush2.msra.mxu0 0.0
    %1292 = vmatprep.subr.mxu0 0.0
    %1293 = vmatpush2.msra.mxu0 0.0
    %1294 = vmatprep.subr.mxu0 0.0
    %1295 = vmatpush2.msra.mxu0 0.0
    %1296 = vmatprep.subr.mxu0 0.0
    %1297 = vmatpush2.msra.mxu0 0.0
    %1298 = vmatprep.subr.mxu0 0.0
    %1299 = vmatpush2.msra.mxu0 0.0
    %1300 = vmatprep.subr.mxu0 0.0
    %1301 = vmatpush2.msra.mxu0 0.0
    %1302 = vmatprep.subr.mxu0 0.0
    %1303 = vmatpush2.msra.mxu0 0.0
    %1304 = vmatprep.subr.mxu0 0.0
    %1305 = vmatpush2.msra.mxu0 0.0
    %1306 = vmatprep.subr.mxu0 0.0
    %1307 = vmatpush2.msra.mxu0 0.0
    %1308 = vmatprep.subr.mxu0 0.0
    %1309 = vmatpush2.msra.mxu0 0.0
    %1310 = vmatprep.subr.mxu0 0.0
    %1311 = vmatpush2.msra.mxu0 0.0
    %1312 = vmatprep.subr.mxu0 0.0
    %1313 = vmatpush2.msra.mxu0 0.0
    %1314 = vmatprep.mubr.f32.mxu0 0.0
    %1315 = vmatmul.mubr.f32.gmra.mxu0 %v1203
    %v1316 = vpop.f32.mrf.mxu0
    %v1317 = vadd.f32 %v1200, %v1316
    %v1318 = vpop.f32.mrf.mxu0
    %1319 = vmatprep.mubr.f32.mxu0 0.0
    %1320 = vmatmul.mubr.f32.gmra.mxu0 %v1206
    %v1321 = vpop.f32.mrf.mxu0
    %v1322 = vadd.f32 %v1200, %v1321
    %v1323 = vpop.f32.mrf.mxu0
    %1324 = vmatprep.mubr.f32.mxu0 0.0
    %1325 = vmatmul.mubr.f32.gmra.mxu0 %v1209
    %v1326 = vpop.f32.mrf.mxu0
    %v1327 = vadd.f32 %v1200, %v1326
    %v1328 = vpop.f32.mrf.mxu0
    %1329 = vmatprep.mubr.f32.mxu0 0.0
    %1330 = vmatmul.mubr.f32.gmra.mxu0 %v1212
    %v1331 = vpop.f32.mrf.mxu0
    %v1332 = vadd.f32 %v1200, %v1331
    %v1333 = vpop.f32.mrf.mxu0
    %1334 = vmatprep.mubr.f32.mxu0 0.0
    %1335 = vmatmul.mubr.f32.gmra.mxu0 %v1215
    %v1336 = vpop.f32.mrf.mxu0
    %v1337 = vadd.f32 %v1200, %v1336
    %v1338 = vpop.f32.mrf.mxu0
    %1339 = vmatprep.mubr.f32.mxu0 0.0
    %1340 = vmatmul.mubr.f32.gmra.mxu0 %v1218
    %v1341 = vpop.f32.mrf.mxu0
    %v1342 = vadd.f32 %v1200, %v1341
    %v1343 = vpop.f32.mrf.mxu0
    %1344 = vmatprep.mubr.f32.mxu0 0.0
    %1345 = vmatmul.mubr.f32.gmra.mxu0 %v1221
    %v1346 = vpop.f32.mrf.mxu0
    %v1347 = vadd.f32 %v1200, %v1346
    %v1348 = vpop.f32.mrf.mxu0
    %1349 = vmatprep.mubr.f32.mxu0 0.0
    %1350 = vmatmul.mubr.f32.gmra.mxu0 %v1224
    %v1351 = vpop.f32.mrf.mxu0
    %v1352 = vadd.f32 %v1200, %v1351
    %v1353 = vpop.f32.mrf.mxu0
    %1354 = vmatprep.mubr.f32.mxu0 0.0
    %1355 = vmatmul.mubr.f32.gmra.mxu0 %v1227
    %v1356 = vpop.f32.mrf.mxu0
    %v1357 = vadd.f32 %v1200, %v1356
    %v1358 = vpop.f32.mrf.mxu0
    %1359 = vmatprep.mubr.f32.mxu0 0.0
    %1360 = vmatmul.mubr.f32.gmra.mxu0 %v1230
    %v1361 = vpop.f32.mrf.mxu0
    %v1362 = vadd.f32 %v1200, %v1361
    %v1363 = vpop.f32.mrf.mxu0
    %1364 = vmatprep.mubr.f32.mxu0 0.0
    %1365 = vmatmul.mubr.f32.gmra.mxu0 %v1233
    %v1366 = vpop.f32.mrf.mxu0
    %v1367 = vadd.f32 %v1200, %v1366
    %v1368 = vpop.f32.mrf.mxu0
    %1369 = vmatprep.mubr.f32.mxu0 0.0
    %1370 = vmatmul.mubr.f32.gmra.mxu0 %v1236
    %v1371 = vpop.f32.mrf.mxu0
    %v1372 = vadd.f32 %v1200, %v1371
    %v1373 = vpop.f32.mrf.mxu0
    %1374 = vmatprep.mubr.f32.mxu0 0.0
    %1375 = vmatmul.mubr.f32.gmra.mxu0 %v1239
    %v1376 = vpop.f32.mrf.mxu0
    %v1377 = vadd.f32 %v1200, %v1376
    %v1378 = vpop.f32.mrf.mxu0
    %1379 = vmatprep.mubr.f32.mxu0 0.0
    %1380 = vmatmul.mubr.f32.gmra.mxu0 %v1242
    %v1381 = vpop.f32.mrf.mxu0
    %v1382 = vadd.f32 %v1200, %v1381
    %v1383 = vpop.f32.mrf.mxu0
    %1384 = vmatprep.mubr.f32.mxu0 0.0
    %1385 = vmatmul.mubr.f32.gmra.mxu0 %v1245
    %v1386 = vpop.f32.mrf.mxu0
    %v1387 = vadd.f32 %v1200, %v1386
    %v1388 = vpop.f32.mrf.mxu0
    %1389 = vmatprep.mubr.f32.mxu0 0.0
    %1390 = vmatmul.mubr.f32.gmra.mxu0 %v1248
    %v1391 = vpop.f32.mrf.mxu0
    %v1392 = vadd.f32 %v1200, %v1391
    %v1393 = vpop.f32.mrf.mxu0
    %1394 = vdwg.mxu0
    %v1395 = vmax.f32 %v1317, 0.0
    %v1396 = vmax.f32 %v1322, 0.0
    %v1397 = vmax.f32 %v1327, 0.0
    %v1398 = vmax.f32 %v1332, 0.0
    %v1399 = vmax.f32 %v1337, 0.0
    %v1400 = vmax.f32 %v1342, 0.0
    %v1401 = vmax.f32 %v1347, 0.0
    %v1402 = vmax.f32 %v1352, 0.0
    %v1403 = vmax.f32 %v1357, 0.0
    %v1404 = vmax.f32 %v1362, 0.0
    %v1405 = vmax.f32 %v1367, 0.0
    %v1406 = vmax.f32 %v1372, 0.0
    %v1407 = vmax.f32 %v1377, 0.0
    %v1408 = vmax.f32 %v1382, 0.0
    %v1409 = vmax.f32 %v1387, 0.0
    %v1410 = vmax.f32 %v1392, 0.0
    %v1411 = vld [vmem:[#allocation2 + $0x1d0] sm:$0x1]
    %v1412 = vld [vmem:[#allocation2 + $0x1d8] sm:$0x1]
    %v1413 = vlaneseq
    %v1414 = vshrl.u32 %v1413, 7
    %v1415 = vsub.s32 0, %v1414
    %v1416 = vrot.slane %v1411, %v1415
    %v1417 = vmul.f32 %v288, %v1416
    %v1418 = vmul.f32 %v291, %v1416
    %v1419 = vmul.f32 %v294, %v1416
    %v1420 = vmul.f32 %v297, %v1416
    %v1421 = vmul.f32 %v300, %v1416
    %v1422 = vmul.f32 %v303, %v1416
    %v1423 = vmul.f32 %v306, %v1416
    %v1424 = vmul.f32 %v309, %v1416
    %v1425 = vmul.f32 %v312, %v1416
    %v1426 = vmul.f32 %v315, %v1416
    %v1427 = vmul.f32 %v318, %v1416
    %v1428 = vmul.f32 %v321, %v1416
    %v1429 = vmul.f32 %v324, %v1416
    %v1430 = vmul.f32 %v327, %v1416
    %v1431 = vmul.f32 %v330, %v1416
    %v1432 = vmul.f32 %v333, %v1416
    %v1433 = vlaneseq
    %v1434 = vshrl.u32 %v1433, 7
    %v1435 = vsub.s32 0, %v1434
    %v1436 = vrot.slane %v1412, %v1435
    %v1437 = vadd.f32 %v1417, %v1436
    %v1438 = vadd.f32 %v1418, %v1436
    %v1439 = vadd.f32 %v1419, %v1436
    %v1440 = vadd.f32 %v1420, %v1436
    %v1441 = vadd.f32 %v1421, %v1436
    %v1442 = vadd.f32 %v1422, %v1436
    %v1443 = vadd.f32 %v1423, %v1436
    %v1444 = vadd.f32 %v1424, %v1436
    %v1445 = vadd.f32 %v1425, %v1436
    %v1446 = vadd.f32 %v1426, %v1436
    %v1447 = vadd.f32 %v1427, %v1436
    %v1448 = vadd.f32 %v1428, %v1436
    %v1449 = vadd.f32 %v1429, %v1436
    %v1450 = vadd.f32 %v1430, %v1436
    %v1451 = vadd.f32 %v1431, %v1436
    %v1452 = vadd.f32 %v1432, %v1436
    %v1453 = vadd.f32 %v1395, %v1437
    %v1454 = vadd.f32 %v1396, %v1438
    %v1455 = vadd.f32 %v1397, %v1439
    %v1456 = vadd.f32 %v1398, %v1440
    %v1457 = vadd.f32 %v1399, %v1441
    %v1458 = vadd.f32 %v1400, %v1442
    %v1459 = vadd.f32 %v1401, %v1443
    %v1460 = vadd.f32 %v1402, %v1444
    %v1461 = vadd.f32 %v1403, %v1445
    %v1462 = vadd.f32 %v1404, %v1446
    %v1463 = vadd.f32 %v1405, %v1447
    %v1464 = vadd.f32 %v1406, %v1448
    %v1465 = vadd.f32 %v1407, %v1449
    %v1466 = vadd.f32 %v1408, %v1450
    %v1467 = vadd.f32 %v1409, %v1451
    %v1468 = vadd.f32 %v1410, %v1452
    %v1469 = vmax.f32 %v1453, 0.0
    %v1470 = vmax.f32 %v1454, 0.0
    %v1471 = vmax.f32 %v1455, 0.0
    %v1472 = vmax.f32 %v1456, 0.0
    %v1473 = vmax.f32 %v1457, 0.0
    %v1474 = vmax.f32 %v1458, 0.0
    %v1475 = vmax.f32 %v1459, 0.0
    %v1476 = vmax.f32 %v1460, 0.0
    %v1477 = vmax.f32 %v1461, 0.0
    %v1478 = vmax.f32 %v1462, 0.0
    %v1479 = vmax.f32 %v1463, 0.0
    %v1480 = vmax.f32 %v1464, 0.0
    %v1481 = vmax.f32 %v1465, 0.0
    %v1482 = vmax.f32 %v1466, 0.0
    %v1483 = vmax.f32 %v1467, 0.0
    %v1484 = vmax.f32 %v1468, 0.0
    %v1485 = vld [vmem:[#allocation2 + $0x1e0] sm:$0xff]
    %v1486 = vld [vmem:[#allocation2 + $0x1e8] sm:$0xff]
    %v1487 = vld [vmem:[#allocation2 + $0x1f0] sm:$0xff]
    %v1488 = vld [vmem:[#allocation2 + $0x1f8] sm:$0xff]
    %v1489 = vld [vmem:[#allocation2 + $0x200] sm:$0xff]
    %v1490 = vld [vmem:[#allocation2 + $0x208] sm:$0xff]
    %v1491 = vrot.slane %v1469, 4
    %v1492 = vrot.slane %v1470, 4
    %v1493 = vrot.slane %v1471, 4
    %v1494 = vrot.slane %v1472, 4
    %v1495 = vrot.slane %v1473, 4
    %v1496 = vrot.slane %v1474, 4
    %v1497 = vrot.slane %v1475, 4
    %v1498 = vrot.slane %v1476, 4
    %v1499 = vrot.slane %v1477, 4
    %v1500 = vrot.slane %v1478, 4
    %v1501 = vrot.slane %v1479, 4
    %v1502 = vrot.slane %v1480, 4
    %v1503 = vrot.slane %v1481, 4
    %v1504 = vrot.slane %v1482, 4
    %v1505 = vrot.slane %v1483, 4
    %v1506 = vrot.slane %v1484, 4
    %vm1507 = vcmp.lt.s32.totalorder %v368, 4
    %v1508 = vsel %vm1507, %v1505, %v1506
    %v1509 = vsel %vm1507, %v1504, %v1505
    %v1510 = vsel %vm1507, %v1503, %v1504
    %v1511 = vsel %vm1507, %v1502, %v1503
    %v1512 = vsel %vm1507, %v1501, %v1502
    %v1513 = vsel %vm1507, %v1500, %v1501
    %v1514 = vsel %vm1507, %v1499, %v1500
    %v1515 = vsel %vm1507, %v1498, %v1499
    %v1516 = vsel %vm1507, %v1497, %v1498
    %v1517 = vsel %vm1507, %v1496, %v1497
    %v1518 = vsel %vm1507, %v1495, %v1496
    %v1519 = vsel %vm1507, %v1494, %v1495
    %v1520 = vsel %vm1507, %v1493, %v1494
    %v1521 = vsel %vm1507, %v1492, %v1493
    %v1522 = vsel %vm1507, %v1491, %v1492
    %v1523 = vsel %vm1507, %v1506, %v1491
    %1524 = vset.pattern.permute.xlu0 2
    %1525 = vperm.xlu0 %1524, %v334
    %v1526 = vpop.permute.xlu0 %1525
    %1528 = vset.pattern.permute.xlu0 2
    %1529 = vperm.xlu0 %1528, %v335
    %v1530 = vpop.permute.xlu0 %1529
    %1532 = vset.pattern.permute.xlu0 2
    %1533 = vperm.xlu0 %1532, %v336
    %v1534 = vpop.permute.xlu0 %1533
    %1536 = vset.pattern.permute.xlu0 2
    %1537 = vperm.xlu0 %1536, %v337
    %v1538 = vpop.permute.xlu0 %1537
    %1540 = vset.pattern.permute.xlu0 2
    %1541 = vperm.xlu0 %1540, %v338
    %v1542 = vpop.permute.xlu0 %1541
    %1544 = vset.pattern.permute.xlu0 2
    %1545 = vperm.xlu0 %1544, %v339
    %v1546 = vpop.permute.xlu0 %1545
    %1548 = vset.pattern.permute.xlu0 2
    %1549 = vperm.xlu0 %1548, %v340
    %v1550 = vpop.permute.xlu0 %1549
    %1552 = vset.pattern.permute.xlu0 2
    %1553 = vperm.xlu0 %1552, %v341
    %v1554 = vpop.permute.xlu0 %1553
    %1556 = vset.pattern.permute.xlu0 2
    %1557 = vperm.xlu0 %1556, %v342
    %v1558 = vpop.permute.xlu0 %1557
    %1560 = vset.pattern.permute.xlu0 2
    %1561 = vperm.xlu0 %1560, %v343
    %v1562 = vpop.permute.xlu0 %1561
    %1564 = vset.pattern.permute.xlu0 2
    %1565 = vperm.xlu0 %1564, %v344
    %v1566 = vpop.permute.xlu0 %1565
    %1568 = vset.pattern.permute.xlu0 2
    %1569 = vperm.xlu0 %1568, %v345
    %v1570 = vpop.permute.xlu0 %1569
    %1572 = vset.pattern.permute.xlu0 2
    %1573 = vperm.xlu0 %1572, %v346
    %v1574 = vpop.permute.xlu0 %1573
    %1576 = vset.pattern.permute.xlu0 2
    %1577 = vperm.xlu0 %1576, %v347
    %v1578 = vpop.permute.xlu0 %1577
    %1580 = vset.pattern.permute.xlu0 2
    %1581 = vperm.xlu0 %1580, %v348
    %v1582 = vpop.permute.xlu0 %1581
    %1584 = vset.pattern.permute.xlu0 2
    %1585 = vperm.xlu0 %1584, %v349
    %v1586 = vpop.permute.xlu0 %1585
    %v1588 = vmul.f32 %v1523, %v1526
    %v1589 = vmul.f32 %v1522, %v1530
    %v1590 = vmul.f32 %v1521, %v1534
    %v1591 = vmul.f32 %v1520, %v1538
    %v1592 = vmul.f32 %v1519, %v1542
    %v1593 = vmul.f32 %v1518, %v1546
    %v1594 = vmul.f32 %v1517, %v1550
    %v1595 = vmul.f32 %v1516, %v1554
    %v1596 = vmul.f32 %v1515, %v1558
    %v1597 = vmul.f32 %v1514, %v1562
    %v1598 = vmul.f32 %v1513, %v1566
    %v1599 = vmul.f32 %v1512, %v1570
    %v1600 = vmul.f32 %v1511, %v1574
    %v1601 = vmul.f32 %v1510, %v1578
    %v1602 = vmul.f32 %v1509, %v1582
    %v1603 = vmul.f32 %v1508, %v1586
    %v1604 = vrot.slane %v1469, 6
    %v1605 = vrot.slane %v1470, 6
    %v1606 = vrot.slane %v1471, 6
    %v1607 = vrot.slane %v1472, 6
    %v1608 = vrot.slane %v1473, 6
    %v1609 = vrot.slane %v1474, 6
    %v1610 = vrot.slane %v1475, 6
    %v1611 = vrot.slane %v1476, 6
    %v1612 = vrot.slane %v1477, 6
    %v1613 = vrot.slane %v1478, 6
    %v1614 = vrot.slane %v1479, 6
    %v1615 = vrot.slane %v1480, 6
    %v1616 = vrot.slane %v1481, 6
    %v1617 = vrot.slane %v1482, 6
    %v1618 = vrot.slane %v1483, 6
    %v1619 = vrot.slane %v1484, 6
    %v1620 = vsel %vm369, %v1618, %v1619
    %v1621 = vsel %vm369, %v1617, %v1618
    %v1622 = vsel %vm369, %v1616, %v1617
    %v1623 = vsel %vm369, %v1615, %v1616
    %v1624 = vsel %vm369, %v1614, %v1615
    %v1625 = vsel %vm369, %v1613, %v1614
    %v1626 = vsel %vm369, %v1612, %v1613
    %v1627 = vsel %vm369, %v1611, %v1612
    %v1628 = vsel %vm369, %v1610, %v1611
    %v1629 = vsel %vm369, %v1609, %v1610
    %v1630 = vsel %vm369, %v1608, %v1609
    %v1631 = vsel %vm369, %v1607, %v1608
    %v1632 = vsel %vm369, %v1606, %v1607
    %v1633 = vsel %vm369, %v1605, %v1606
    %v1634 = vsel %vm369, %v1604, %v1605
    %v1635 = vsel %vm369, %v1619, %v1604
    %v1636 = vmul.f32 %v1635, %v844
    %v1637 = vmul.f32 %v1634, %v848
    %v1638 = vmul.f32 %v1633, %v852
    %v1639 = vmul.f32 %v1632, %v856
    %v1640 = vmul.f32 %v1631, %v860
    %v1641 = vmul.f32 %v1630, %v864
    %v1642 = vmul.f32 %v1629, %v868
    %v1643 = vmul.f32 %v1628, %v872
    %v1644 = vmul.f32 %v1627, %v876
    %v1645 = vmul.f32 %v1626, %v880
    %v1646 = vmul.f32 %v1625, %v884
    %v1647 = vmul.f32 %v1624, %v888
    %v1648 = vmul.f32 %v1623, %v892
    %v1649 = vmul.f32 %v1622, %v896
    %v1650 = vmul.f32 %v1621, %v900
    %v1651 = vmul.f32 %v1620, %v904
    %1668 = vrot.lane.b32.xlu0 %v1636, 16
    %v1669 = vpop.permute.xlu0 %1668
    %1670 = vrot.lane.b32.xlu0 %v1637, 16
    %v1671 = vpop.permute.xlu0 %1670
    %1672 = vrot.lane.b32.xlu0 %v1638, 16
    %v1673 = vpop.permute.xlu0 %1672
    %1674 = vrot.lane.b32.xlu0 %v1639, 16
    %v1675 = vpop.permute.xlu0 %1674
    %1676 = vrot.lane.b32.xlu0 %v1640, 16
    %v1677 = vpop.permute.xlu0 %1676
    %1678 = vrot.lane.b32.xlu0 %v1641, 16
    %v1679 = vpop.permute.xlu0 %1678
    %1680 = vrot.lane.b32.xlu0 %v1642, 16
    %v1681 = vpop.permute.xlu0 %1680
    %1682 = vrot.lane.b32.xlu0 %v1643, 16
    %v1683 = vpop.permute.xlu0 %1682
    %1684 = vrot.lane.b32.xlu0 %v1644, 16
    %v1685 = vpop.permute.xlu0 %1684
    %1686 = vrot.lane.b32.xlu0 %v1645, 16
    %v1687 = vpop.permute.xlu0 %1686
    %1688 = vrot.lane.b32.xlu0 %v1646, 16
    %v1689 = vpop.permute.xlu0 %1688
    %1690 = vrot.lane.b32.xlu0 %v1647, 16
    %v1691 = vpop.permute.xlu0 %1690
    %1692 = vrot.lane.b32.xlu0 %v1648, 16
    %v1693 = vpop.permute.xlu0 %1692
    %1694 = vrot.lane.b32.xlu0 %v1649, 16
    %v1695 = vpop.permute.xlu0 %1694
    %1696 = vrot.lane.b32.xlu0 %v1650, 16
    %v1697 = vpop.permute.xlu0 %1696
    %1698 = vrot.lane.b32.xlu0 %v1651, 16
    %v1699 = vpop.permute.xlu0 %1698
    %1732 = vrot.lane.b32.xlu0 %v1469, 32
    %v1733 = vpop.permute.xlu0 %1732
    %1734 = vrot.lane.b32.xlu0 %v1470, 32
    %v1735 = vpop.permute.xlu0 %1734
    %1736 = vrot.lane.b32.xlu0 %v1471, 32
    %v1737 = vpop.permute.xlu0 %1736
    %1738 = vrot.lane.b32.xlu0 %v1472, 32
    %v1739 = vpop.permute.xlu0 %1738
    %1740 = vrot.lane.b32.xlu0 %v1473, 32
    %v1741 = vpop.permute.xlu0 %1740
    %1742 = vrot.lane.b32.xlu0 %v1474, 32
    %v1743 = vpop.permute.xlu0 %1742
    %1744 = vrot.lane.b32.xlu0 %v1475, 32
    %v1745 = vpop.permute.xlu0 %1744
    %1746 = vrot.lane.b32.xlu0 %v1476, 32
    %v1747 = vpop.permute.xlu0 %1746
    %1748 = vrot.lane.b32.xlu0 %v1477, 32
    %v1749 = vpop.permute.xlu0 %1748
    %1750 = vrot.lane.b32.xlu0 %v1478, 32
    %v1751 = vpop.permute.xlu0 %1750
    %1752 = vrot.lane.b32.xlu0 %v1479, 32
    %v1753 = vpop.permute.xlu0 %1752
    %1754 = vrot.lane.b32.xlu0 %v1480, 32
    %v1755 = vpop.permute.xlu0 %1754
    %1756 = vrot.lane.b32.xlu0 %v1481, 32
    %v1757 = vpop.permute.xlu0 %1756
    %1758 = vrot.lane.b32.xlu0 %v1482, 32
    %v1759 = vpop.permute.xlu0 %1758
    %1760 = vrot.lane.b32.xlu0 %v1483, 32
    %v1761 = vpop.permute.xlu0 %1760
    %1762 = vrot.lane.b32.xlu0 %v1484, 32
    %v1763 = vpop.permute.xlu0 %1762
    %v1780 = vsel %vm1162, %v1588, %v1669
    %v1781 = vsel %vm1162, %v1589, %v1671
    %v1782 = vsel %vm1162, %v1590, %v1673
    %v1783 = vsel %vm1162, %v1591, %v1675
    %v1784 = vsel %vm1162, %v1592, %v1677
    %v1785 = vsel %vm1162, %v1593, %v1679
    %v1786 = vsel %vm1162, %v1594, %v1681
    %v1787 = vsel %vm1162, %v1595, %v1683
    %v1788 = vsel %vm1162, %v1596, %v1685
    %v1789 = vsel %vm1162, %v1597, %v1687
    %v1790 = vsel %vm1162, %v1598, %v1689
    %v1791 = vsel %vm1162, %v1599, %v1691
    %v1792 = vsel %vm1162, %v1600, %v1693
    %v1793 = vsel %vm1162, %v1601, %v1695
    %v1794 = vsel %vm1162, %v1602, %v1697
    %v1795 = vsel %vm1162, %v1603, %v1699
    %v1796 = vsel %vm1179, %v1780, %v1733
    %v1797 = vsel %vm1179, %v1781, %v1735
    %v1798 = vsel %vm1179, %v1782, %v1737
    %v1799 = vsel %vm1179, %v1783, %v1739
    %v1800 = vsel %vm1179, %v1784, %v1741
    %v1801 = vsel %vm1179, %v1785, %v1743
    %v1802 = vsel %vm1179, %v1786, %v1745
    %v1803 = vsel %vm1179, %v1787, %v1747
    %v1804 = vsel %vm1179, %v1788, %v1749
    %v1805 = vsel %vm1179, %v1789, %v1751
    %v1806 = vsel %vm1179, %v1790, %v1753
    %v1807 = vsel %vm1179, %v1791, %v1755
    %v1808 = vsel %vm1179, %v1792, %v1757
    %v1809 = vsel %vm1179, %v1793, %v1759
    %v1810 = vsel %vm1179, %v1794, %v1761
    %v1811 = vsel %vm1179, %v1795, %v1763
    %v1812 = vld [vmem:[#allocation2 + $0x210] sm:$0x1]
    %v1813 = vlaneseq
    %v1814 = vshrl.u32 %v1813, 7
    %v1815 = vsub.s32 0, %v1814
    %v1816 = vrot.slane %v1812, %v1815
    %v1818 = vsel %vm1201, %v1796, 0
    %v1821 = vsel %vm1201, %v1797, 0
    %v1824 = vsel %vm1201, %v1798, 0
    %v1827 = vsel %vm1201, %v1799, 0
    %v1830 = vsel %vm1201, %v1800, 0
    %v1833 = vsel %vm1201, %v1801, 0
    %v1836 = vsel %vm1201, %v1802, 0
    %v1839 = vsel %vm1201, %v1803, 0
    %v1842 = vsel %vm1201, %v1804, 0
    %v1845 = vsel %vm1201, %v1805, 0
    %v1848 = vsel %vm1201, %v1806, 0
    %v1851 = vsel %vm1201, %v1807, 0
    %v1854 = vsel %vm1201, %v1808, 0
    %v1857 = vsel %vm1201, %v1809, 0
    %v1860 = vsel %vm1201, %v1810, 0
    %v1863 = vsel %vm1201, %v1811, 0
    %1865 = vmatprep.subr.mxu0 0.0
    %1866 = vmatpush1.msra.mxu0 0.0
    %1867 = vmatprep.subr.mxu0 0.0
    %1868 = vmatpush1.msra.mxu0 0.0
    %1869 = vmatprep.subr.mxu0 0.0
    %1870 = vmatpush1.msra.mxu0 0.0
    %1871 = vmatprep.subr.mxu0 0.0
    %1872 = vmatpush1.msra.mxu0 0.0
    %1873 = vmatprep.subr.mxu0 0.0
    %1874 = vmatpush1.msra.mxu0 0.0
    %1875 = vmatprep.subr.mxu0 0.0
    %1876 = vmatpush1.msra.mxu0 0.0
    %1877 = vmatprep.subr.mxu0 0.0
    %1878 = vmatpush1.msra.mxu0 0.0
    %1879 = vmatprep.subr.mxu0 0.0
    %1880 = vmatpush1.msra.mxu0 0.0
    %1881 = vmatprep.subr.mxu0 0.0
    %1882 = vmatpush1.msra.mxu0 0.0
    %1883 = vmatprep.subr.mxu0 0.0
    %1884 = vmatpush1.msra.mxu0 0.0
    %1885 = vmatprep.subr.mxu0 0.0
    %1886 = vmatpush1.msra.mxu0 %v1490
    %1887 = vmatprep.subr.mxu0 0.0
    %1888 = vmatpush1.msra.mxu0 %v1489
    %1889 = vmatprep.subr.mxu0 0.0
    %1890 = vmatpush1.msra.mxu0 %v1488
    %1891 = vmatprep.subr.mxu0 0.0
    %1892 = vmatpush1.msra.mxu0 %v1487
    %1893 = vmatprep.subr.mxu0 0.0
    %1894 = vmatpush1.msra.mxu0 %v1486
    %1895 = vmatprep.subr.mxu0 0.0
    %1896 = vmatpush1.msra.mxu0 %v1485
    %1897 = vmatprep.subr.mxu0 0.0
    %1898 = vmatpush2.msra.mxu0 0.0
    %1899 = vmatprep.subr.mxu0 0.0
    %1900 = vmatpush2.msra.mxu0 0.0
    %1901 = vmatprep.subr.mxu0 0.0
    %1902 = vmatpush2.msra.mxu0 0.0
    %1903 = vmatprep.subr.mxu0 0.0
    %1904 = vmatpush2.msra.mxu0 0.0
    %1905 = vmatprep.subr.mxu0 0.0
    %1906 = vmatpush2.msra.mxu0 0.0
    %1907 = vmatprep.subr.mxu0 0.0
    %1908 = vmatpush2.msra.mxu0 0.0
    %1909 = vmatprep.subr.mxu0 0.0
    %1910 = vmatpush2.msra.mxu0 0.0
    %1911 = vmatprep.subr.mxu0 0.0
    %1912 = vmatpush2.msra.mxu0 0.0
    %1913 = vmatprep.subr.mxu0 0.0
    %1914 = vmatpush2.msra.mxu0 0.0
    %1915 = vmatprep.subr.mxu0 0.0
    %1916 = vmatpush2.msra.mxu0 0.0
    %1917 = vmatprep.subr.mxu0 0.0
    %1918 = vmatpush2.msra.mxu0 0.0
    %1919 = vmatprep.subr.mxu0 0.0
    %1920 = vmatpush2.msra.mxu0 0.0
    %1921 = vmatprep.subr.mxu0 0.0
    %1922 = vmatpush2.msra.mxu0 0.0
    %1923 = vmatprep.subr.mxu0 0.0
    %1924 = vmatpush2.msra.mxu0 0.0
    %1925 = vmatprep.subr.mxu0 0.0
    %1926 = vmatpush2.msra.mxu0 0.0
    %1927 = vmatprep.subr.mxu0 0.0
    %1928 = vmatpush2.msra.mxu0 0.0
    %1929 = vmatprep.mubr.f32.mxu0 0.0
    %1930 = vmatmul.mubr.f32.gmra.mxu0 %v1818
    %v1931 = vpop.f32.mrf.mxu0
    %v1932 = vadd.f32 %v1816, %v1931
    %v1933 = vpop.f32.mrf.mxu0
    %1934 = vmatprep.mubr.f32.mxu0 0.0
    %1935 = vmatmul.mubr.f32.gmra.mxu0 %v1821
    %v1936 = vpop.f32.mrf.mxu0
    %v1937 = vadd.f32 %v1816, %v1936
    %v1938 = vpop.f32.mrf.mxu0
    %1939 = vmatprep.mubr.f32.mxu0 0.0
    %1940 = vmatmul.mubr.f32.gmra.mxu0 %v1824
    %v1941 = vpop.f32.mrf.mxu0
    %v1942 = vadd.f32 %v1816, %v1941
    %v1943 = vpop.f32.mrf.mxu0
    %1944 = vmatprep.mubr.f32.mxu0 0.0
    %1945 = vmatmul.mubr.f32.gmra.mxu0 %v1827
    %v1946 = vpop.f32.mrf.mxu0
    %v1947 = vadd.f32 %v1816, %v1946
    %v1948 = vpop.f32.mrf.mxu0
    %1949 = vmatprep.mubr.f32.mxu0 0.0
    %1950 = vmatmul.mubr.f32.gmra.mxu0 %v1830
    %v1951 = vpop.f32.mrf.mxu0
    %v1952 = vadd.f32 %v1816, %v1951
    %v1953 = vpop.f32.mrf.mxu0
    %1954 = vmatprep.mubr.f32.mxu0 0.0
    %1955 = vmatmul.mubr.f32.gmra.mxu0 %v1833
    %v1956 = vpop.f32.mrf.mxu0
    %v1957 = vadd.f32 %v1816, %v1956
    %v1958 = vpop.f32.mrf.mxu0
    %1959 = vmatprep.mubr.f32.mxu0 0.0
    %1960 = vmatmul.mubr.f32.gmra.mxu0 %v1836
    %v1961 = vpop.f32.mrf.mxu0
    %v1962 = vadd.f32 %v1816, %v1961
    %v1963 = vpop.f32.mrf.mxu0
    %1964 = vmatprep.mubr.f32.mxu0 0.0
    %1965 = vmatmul.mubr.f32.gmra.mxu0 %v1839
    %v1966 = vpop.f32.mrf.mxu0
    %v1967 = vadd.f32 %v1816, %v1966
    %v1968 = vpop.f32.mrf.mxu0
    %1969 = vmatprep.mubr.f32.mxu0 0.0
    %1970 = vmatmul.mubr.f32.gmra.mxu0 %v1842
    %v1971 = vpop.f32.mrf.mxu0
    %v1972 = vadd.f32 %v1816, %v1971
    %v1973 = vpop.f32.mrf.mxu0
    %1974 = vmatprep.mubr.f32.mxu0 0.0
    %1975 = vmatmul.mubr.f32.gmra.mxu0 %v1845
    %v1976 = vpop.f32.mrf.mxu0
    %v1977 = vadd.f32 %v1816, %v1976
    %v1978 = vpop.f32.mrf.mxu0
    %1979 = vmatprep.mubr.f32.mxu0 0.0
    %1980 = vmatmul.mubr.f32.gmra.mxu0 %v1848
    %v1981 = vpop.f32.mrf.mxu0
    %v1982 = vadd.f32 %v1816, %v1981
    %v1983 = vpop.f32.mrf.mxu0
    %1984 = vmatprep.mubr.f32.mxu0 0.0
    %1985 = vmatmul.mubr.f32.gmra.mxu0 %v1851
    %v1986 = vpop.f32.mrf.mxu0
    %v1987 = vadd.f32 %v1816, %v1986
    %v1988 = vpop.f32.mrf.mxu0
    %1989 = vmatprep.mubr.f32.mxu0 0.0
    %1990 = vmatmul.mubr.f32.gmra.mxu0 %v1854
    %v1991 = vpop.f32.mrf.mxu0
    %v1992 = vadd.f32 %v1816, %v1991
    %v1993 = vpop.f32.mrf.mxu0
    %1994 = vmatprep.mubr.f32.mxu0 0.0
    %1995 = vmatmul.mubr.f32.gmra.mxu0 %v1857
    %v1996 = vpop.f32.mrf.mxu0
    %v1997 = vadd.f32 %v1816, %v1996
    %v1998 = vpop.f32.mrf.mxu0
    %1999 = vmatprep.mubr.f32.mxu0 0.0
    %2000 = vmatmul.mubr.f32.gmra.mxu0 %v1860
    %v2001 = vpop.f32.mrf.mxu0
    %v2002 = vadd.f32 %v1816, %v2001
    %v2003 = vpop.f32.mrf.mxu0
    %2004 = vmatprep.mubr.f32.mxu0 0.0
    %2005 = vmatmul.mubr.f32.gmra.mxu0 %v1863
    %v2006 = vpop.f32.mrf.mxu0
    %v2007 = vadd.f32 %v1816, %v2006
    %v2008 = vpop.f32.mrf.mxu0
    %2009 = vdwg.mxu0
    %v2010 = vmax.f32 %v1932, 0.0
    %v2011 = vmax.f32 %v1937, 0.0
    %v2012 = vmax.f32 %v1942, 0.0
    %v2013 = vmax.f32 %v1947, 0.0
    %v2014 = vmax.f32 %v1952, 0.0
    %v2015 = vmax.f32 %v1957, 0.0
    %v2016 = vmax.f32 %v1962, 0.0
    %v2017 = vmax.f32 %v1967, 0.0
    %v2018 = vmax.f32 %v1972, 0.0
    %v2019 = vmax.f32 %v1977, 0.0
    %v2020 = vmax.f32 %v1982, 0.0
    %v2021 = vmax.f32 %v1987, 0.0
    %v2022 = vmax.f32 %v1992, 0.0
    %v2023 = vmax.f32 %v1997, 0.0
    %v2024 = vmax.f32 %v2002, 0.0
    %v2025 = vmax.f32 %v2007, 0.0
    %v2026 = vld [vmem:[#allocation2 + $0x218] sm:$0x3f]
    %v2027 = vrot.slane %v2010, 4
    %v2028 = vrot.slane %v2011, 4
    %v2029 = vrot.slane %v2012, 4
    %v2030 = vrot.slane %v2013, 4
    %v2031 = vrot.slane %v2014, 4
    %v2032 = vrot.slane %v2015, 4
    %v2033 = vrot.slane %v2016, 4
    %v2034 = vrot.slane %v2017, 4
    %v2035 = vrot.slane %v2018, 4
    %v2036 = vrot.slane %v2019, 4
    %v2037 = vrot.slane %v2020, 4
    %v2038 = vrot.slane %v2021, 4
    %v2039 = vrot.slane %v2022, 4
    %v2040 = vrot.slane %v2023, 4
    %v2041 = vrot.slane %v2024, 4
    %v2042 = vrot.slane %v2025, 4
    %v2043 = vsel %vm1507, %v2041, %v2042
    %v2044 = vsel %vm1507, %v2040, %v2041
    %v2045 = vsel %vm1507, %v2039, %v2040
    %v2046 = vsel %vm1507, %v2038, %v2039
    %v2047 = vsel %vm1507, %v2037, %v2038
    %v2048 = vsel %vm1507, %v2036, %v2037
    %v2049 = vsel %vm1507, %v2035, %v2036
    %v2050 = vsel %vm1507, %v2034, %v2035
    %v2051 = vsel %vm1507, %v2033, %v2034
    %v2052 = vsel %vm1507, %v2032, %v2033
    %v2053 = vsel %vm1507, %v2031, %v2032
    %v2054 = vsel %vm1507, %v2030, %v2031
    %v2055 = vsel %vm1507, %v2029, %v2030
    %v2056 = vsel %vm1507, %v2028, %v2029
    %v2057 = vsel %vm1507, %v2027, %v2028
    %v2058 = vsel %vm1507, %v2042, %v2027
    %v2059 = vmul.f32 %v2058, %v1526
    %v2060 = vmul.f32 %v2057, %v1530
    %v2061 = vmul.f32 %v2056, %v1534
    %v2062 = vmul.f32 %v2055, %v1538
    %v2063 = vmul.f32 %v2054, %v1542
    %v2064 = vmul.f32 %v2053, %v1546
    %v2065 = vmul.f32 %v2052, %v1550
    %v2066 = vmul.f32 %v2051, %v1554
    %v2067 = vmul.f32 %v2050, %v1558
    %v2068 = vmul.f32 %v2049, %v1562
    %v2069 = vmul.f32 %v2048, %v1566
    %v2070 = vmul.f32 %v2047, %v1570
    %v2071 = vmul.f32 %v2046, %v1574
    %v2072 = vmul.f32 %v2045, %v1578
    %v2073 = vmul.f32 %v2044, %v1582
    %v2074 = vmul.f32 %v2043, %v1586
    %v2075 = vrot.slane %v2010, 6
    %v2076 = vrot.slane %v2011, 6
    %v2077 = vrot.slane %v2012, 6
    %v2078 = vrot.slane %v2013, 6
    %v2079 = vrot.slane %v2014, 6
    %v2080 = vrot.slane %v2015, 6
    %v2081 = vrot.slane %v2016, 6
    %v2082 = vrot.slane %v2017, 6
    %v2083 = vrot.slane %v2018, 6
    %v2084 = vrot.slane %v2019, 6
    %v2085 = vrot.slane %v2020, 6
    %v2086 = vrot.slane %v2021, 6
    %v2087 = vrot.slane %v2022, 6
    %v2088 = vrot.slane %v2023, 6
    %v2089 = vrot.slane %v2024, 6
    %v2090 = vrot.slane %v2025, 6
    %v2091 = vsel %vm369, %v2089, %v2090
    %v2092 = vsel %vm369, %v2088, %v2089
    %v2093 = vsel %vm369, %v2087, %v2088
    %v2094 = vsel %vm369, %v2086, %v2087
    %v2095 = vsel %vm369, %v2085, %v2086
    %v2096 = vsel %vm369, %v2084, %v2085
    %v2097 = vsel %vm369, %v2083, %v2084
    %v2098 = vsel %vm369, %v2082, %v2083
    %v2099 = vsel %vm369, %v2081, %v2082
    %v2100 = vsel %vm369, %v2080, %v2081
    %v2101 = vsel %vm369, %v2079, %v2080
    %v2102 = vsel %vm369, %v2078, %v2079
    %v2103 = vsel %vm369, %v2077, %v2078
    %v2104 = vsel %vm369, %v2076, %v2077
    %v2105 = vsel %vm369, %v2075, %v2076
    %v2106 = vsel %vm369, %v2090, %v2075
    %v2107 = vmul.f32 %v2106, %v844
    %v2108 = vmul.f32 %v2105, %v848
    %v2109 = vmul.f32 %v2104, %v852
    %v2110 = vmul.f32 %v2103, %v856
    %v2111 = vmul.f32 %v2102, %v860
    %v2112 = vmul.f32 %v2101, %v864
    %v2113 = vmul.f32 %v2100, %v868
    %v2114 = vmul.f32 %v2099, %v872
    %v2115 = vmul.f32 %v2098, %v876
    %v2116 = vmul.f32 %v2097, %v880
    %v2117 = vmul.f32 %v2096, %v884
    %v2118 = vmul.f32 %v2095, %v888
    %v2119 = vmul.f32 %v2094, %v892
    %v2120 = vmul.f32 %v2093, %v896
    %v2121 = vmul.f32 %v2092, %v900
    %v2122 = vmul.f32 %v2091, %v904
    %2139 = vrot.lane.b32.xlu0 %v2107, 2
    %v2140 = vpop.permute.xlu0 %2139
    %2141 = vrot.lane.b32.xlu0 %v2108, 2
    %v2142 = vpop.permute.xlu0 %2141
    %2143 = vrot.lane.b32.xlu0 %v2109, 2
    %v2144 = vpop.permute.xlu0 %2143
    %2145 = vrot.lane.b32.xlu0 %v2110, 2
    %v2146 = vpop.permute.xlu0 %2145
    %2147 = vrot.lane.b32.xlu0 %v2111, 2
    %v2148 = vpop.permute.xlu0 %2147
    %2149 = vrot.lane.b32.xlu0 %v2112, 2
    %v2150 = vpop.permute.xlu0 %2149
    %2151 = vrot.lane.b32.xlu0 %v2113, 2
    %v2152 = vpop.permute.xlu0 %2151
    %2153 = vrot.lane.b32.xlu0 %v2114, 2
    %v2154 = vpop.permute.xlu0 %2153
    %2155 = vrot.lane.b32.xlu0 %v2115, 2
    %v2156 = vpop.permute.xlu0 %2155
    %2157 = vrot.lane.b32.xlu0 %v2116, 2
    %v2158 = vpop.permute.xlu0 %2157
    %2159 = vrot.lane.b32.xlu0 %v2117, 2
    %v2160 = vpop.permute.xlu0 %2159
    %2161 = vrot.lane.b32.xlu0 %v2118, 2
    %v2162 = vpop.permute.xlu0 %2161
    %2163 = vrot.lane.b32.xlu0 %v2119, 2
    %v2164 = vpop.permute.xlu0 %2163
    %2165 = vrot.lane.b32.xlu0 %v2120, 2
    %v2166 = vpop.permute.xlu0 %2165
    %2167 = vrot.lane.b32.xlu0 %v2121, 2
    %v2168 = vpop.permute.xlu0 %2167
    %2169 = vrot.lane.b32.xlu0 %v2122, 2
    %v2170 = vpop.permute.xlu0 %2169
    %2203 = vrot.lane.b32.xlu0 %v2010, 4
    %v2204 = vpop.permute.xlu0 %2203
    %2205 = vrot.lane.b32.xlu0 %v2011, 4
    %v2206 = vpop.permute.xlu0 %2205
    %2207 = vrot.lane.b32.xlu0 %v2012, 4
    %v2208 = vpop.permute.xlu0 %2207
    %2209 = vrot.lane.b32.xlu0 %v2013, 4
    %v2210 = vpop.permute.xlu0 %2209
    %2211 = vrot.lane.b32.xlu0 %v2014, 4
    %v2212 = vpop.permute.xlu0 %2211
    %2213 = vrot.lane.b32.xlu0 %v2015, 4
    %v2214 = vpop.permute.xlu0 %2213
    %2215 = vrot.lane.b32.xlu0 %v2016, 4
    %v2216 = vpop.permute.xlu0 %2215
    %2217 = vrot.lane.b32.xlu0 %v2017, 4
    %v2218 = vpop.permute.xlu0 %2217
    %2219 = vrot.lane.b32.xlu0 %v2018, 4
    %v2220 = vpop.permute.xlu0 %2219
    %2221 = vrot.lane.b32.xlu0 %v2019, 4
    %v2222 = vpop.permute.xlu0 %2221
    %2223 = vrot.lane.b32.xlu0 %v2020, 4
    %v2224 = vpop.permute.xlu0 %2223
    %2225 = vrot.lane.b32.xlu0 %v2021, 4
    %v2226 = vpop.permute.xlu0 %2225
    %2227 = vrot.lane.b32.xlu0 %v2022, 4
    %v2228 = vpop.permute.xlu0 %2227
    %2229 = vrot.lane.b32.xlu0 %v2023, 4
    %v2230 = vpop.permute.xlu0 %2229
    %2231 = vrot.lane.b32.xlu0 %v2024, 4
    %v2232 = vpop.permute.xlu0 %2231
    %2233 = vrot.lane.b32.xlu0 %v2025, 4
    %v2234 = vpop.permute.xlu0 %2233
    %vm2251 = vcmask 15360
    %v2252 = vsel %vm2251, %v2059, %v2140
    %v2253 = vsel %vm2251, %v2060, %v2142
    %v2254 = vsel %vm2251, %v2061, %v2144
    %v2255 = vsel %vm2251, %v2062, %v2146
    %v2256 = vsel %vm2251, %v2063, %v2148
    %v2257 = vsel %vm2251, %v2064, %v2150
    %v2258 = vsel %vm2251, %v2065, %v2152
    %v2259 = vsel %vm2251, %v2066, %v2154
    %v2260 = vsel %vm2251, %v2067, %v2156
    %v2261 = vsel %vm2251, %v2068, %v2158
    %v2262 = vsel %vm2251, %v2069, %v2160
    %v2263 = vsel %vm2251, %v2070, %v2162
    %v2264 = vsel %vm2251, %v2071, %v2164
    %v2265 = vsel %vm2251, %v2072, %v2166
    %v2266 = vsel %vm2251, %v2073, %v2168
    %v2267 = vsel %vm2251, %v2074, %v2170
    %v2268 = vsel %vm55, %v2252, %v2204
    %v2269 = vsel %vm55, %v2253, %v2206
    %v2270 = vsel %vm55, %v2254, %v2208
    %v2271 = vsel %vm55, %v2255, %v2210
    %v2272 = vsel %vm55, %v2256, %v2212
    %v2273 = vsel %vm55, %v2257, %v2214
    %v2274 = vsel %vm55, %v2258, %v2216
    %v2275 = vsel %vm55, %v2259, %v2218
    %v2276 = vsel %vm55, %v2260, %v2220
    %v2277 = vsel %vm55, %v2261, %v2222
    %v2278 = vsel %vm55, %v2262, %v2224
    %v2279 = vsel %vm55, %v2263, %v2226
    %v2280 = vsel %vm55, %v2264, %v2228
    %v2281 = vsel %vm55, %v2265, %v2230
    %v2282 = vsel %vm55, %v2266, %v2232
    %v2283 = vsel %vm55, %v2267, %v2234
    %v2284 = vld [vmem:[#allocation2 + $0x220] sm:$0x1]
    %v2285 = vlaneseq
    %v2286 = vshrl.u32 %v2285, 7
    %v2287 = vsub.s32 0, %v2286
    %v2288 = vrot.slane %v2284, %v2287
    %vm2289 = vcmask 48128
    %v2291 = vsel %vm2289, %v2268, 0
    %v2294 = vsel %vm2289, %v2269, 0
    %v2297 = vsel %vm2289, %v2270, 0
    %v2300 = vsel %vm2289, %v2271, 0
    %v2303 = vsel %vm2289, %v2272, 0
    %v2306 = vsel %vm2289, %v2273, 0
    %v2309 = vsel %vm2289, %v2274, 0
    %v2312 = vsel %vm2289, %v2275, 0
    %v2315 = vsel %vm2289, %v2276, 0
    %v2318 = vsel %vm2289, %v2277, 0
    %v2321 = vsel %vm2289, %v2278, 0
    %v2324 = vsel %vm2289, %v2279, 0
    %v2327 = vsel %vm2289, %v2280, 0
    %v2330 = vsel %vm2289, %v2281, 0
    %v2333 = vsel %vm2289, %v2282, 0
    %v2336 = vsel %vm2289, %v2283, 0
    %vm2338 = vcmask 1045504
    %v2340 = vsel %vm2338, %v2026, 0
    %2342 = vmatprep.subr.mxu0 0.0
    %2343 = vmatpush1.msra.mxu0 0.0
    %2344 = vmatprep.subr.mxu0 0.0
    %2345 = vmatpush1.msra.mxu0 0.0
    %2346 = vmatprep.subr.mxu0 0.0
    %2347 = vmatpush1.msra.mxu0 0.0
    %2348 = vmatprep.subr.mxu0 0.0
    %2349 = vmatpush1.msra.mxu0 0.0
    %2350 = vmatprep.subr.mxu0 0.0
    %2351 = vmatpush1.msra.mxu0 0.0
    %2352 = vmatprep.subr.mxu0 0.0
    %2353 = vmatpush1.msra.mxu0 0.0
    %2354 = vmatprep.subr.mxu0 0.0
    %2355 = vmatpush1.msra.mxu0 0.0
    %2356 = vmatprep.subr.mxu0 0.0
    %2357 = vmatpush1.msra.mxu0 0.0
    %2358 = vmatprep.subr.mxu0 0.0
    %2359 = vmatpush1.msra.mxu0 0.0
    %2360 = vmatprep.subr.mxu0 0.0
    %2361 = vmatpush1.msra.mxu0 0.0
    %2362 = vmatprep.subr.mxu0 0.0
    %2363 = vmatpush1.msra.mxu0 0.0
    %2364 = vmatprep.subr.mxu0 0.0
    %2365 = vmatpush1.msra.mxu0 0.0
    %2366 = vmatprep.subr.mxu0 0.0
    %2367 = vmatpush1.msra.mxu0 0.0
    %2368 = vmatprep.subr.mxu0 0.0
    %2369 = vmatpush1.msra.mxu0 0.0
    %2370 = vmatprep.subr.mxu0 0.0
    %2371 = vmatpush1.msra.mxu0 0.0
    %2372 = vmatprep.subr.mxu0 0.0
    %2373 = vmatpush1.msra.mxu0 %v2340
    %2374 = vmatprep.subr.mxu0 0.0
    %2375 = vmatpush2.msra.mxu0 0.0
    %2376 = vmatprep.subr.mxu0 0.0
    %2377 = vmatpush2.msra.mxu0 0.0
    %2378 = vmatprep.subr.mxu0 0.0
    %2379 = vmatpush2.msra.mxu0 0.0
    %2380 = vmatprep.subr.mxu0 0.0
    %2381 = vmatpush2.msra.mxu0 0.0
    %2382 = vmatprep.subr.mxu0 0.0
    %2383 = vmatpush2.msra.mxu0 0.0
    %2384 = vmatprep.subr.mxu0 0.0
    %2385 = vmatpush2.msra.mxu0 0.0
    %2386 = vmatprep.subr.mxu0 0.0
    %2387 = vmatpush2.msra.mxu0 0.0
    %2388 = vmatprep.subr.mxu0 0.0
    %2389 = vmatpush2.msra.mxu0 0.0
    %2390 = vmatprep.subr.mxu0 0.0
    %2391 = vmatpush2.msra.mxu0 0.0
    %2392 = vmatprep.subr.mxu0 0.0
    %2393 = vmatpush2.msra.mxu0 0.0
    %2394 = vmatprep.subr.mxu0 0.0
    %2395 = vmatpush2.msra.mxu0 0.0
    %2396 = vmatprep.subr.mxu0 0.0
    %2397 = vmatpush2.msra.mxu0 0.0
    %2398 = vmatprep.subr.mxu0 0.0
    %2399 = vmatpush2.msra.mxu0 0.0
    %2400 = vmatprep.subr.mxu0 0.0
    %2401 = vmatpush2.msra.mxu0 0.0
    %2402 = vmatprep.subr.mxu0 0.0
    %2403 = vmatpush2.msra.mxu0 0.0
    %2404 = vmatprep.subr.mxu0 0.0
    %2405 = vmatpush2.msra.mxu0 0.0
    %2406 = vmatprep.mubr.f32.mxu0 0.0
    %2407 = vmatmul.mubr.f32.gmra.mxu0 %v2291
    %v2408 = vpop.f32.mrf.mxu0
    %v2409 = vadd.f32 %v2288, %v2408
    %v2410 = vpop.f32.mrf.mxu0
    %2411 = vmatprep.mubr.f32.mxu0 0.0
    %2412 = vmatmul.mubr.f32.gmra.mxu0 %v2294
    %v2413 = vpop.f32.mrf.mxu0
    %v2414 = vadd.f32 %v2288, %v2413
    %v2415 = vpop.f32.mrf.mxu0
    %2416 = vmatprep.mubr.f32.mxu0 0.0
    %2417 = vmatmul.mubr.f32.gmra.mxu0 %v2297
    %v2418 = vpop.f32.mrf.mxu0
    %v2419 = vadd.f32 %v2288, %v2418
    %v2420 = vpop.f32.mrf.mxu0
    %2421 = vmatprep.mubr.f32.mxu0 0.0
    %2422 = vmatmul.mubr.f32.gmra.mxu0 %v2300
    %v2423 = vpop.f32.mrf.mxu0
    %v2424 = vadd.f32 %v2288, %v2423
    %v2425 = vpop.f32.mrf.mxu0
    %2426 = vmatprep.mubr.f32.mxu0 0.0
    %2427 = vmatmul.mubr.f32.gmra.mxu0 %v2303
    %v2428 = vpop.f32.mrf.mxu0
    %v2429 = vadd.f32 %v2288, %v2428
    %v2430 = vpop.f32.mrf.mxu0
    %2431 = vmatprep.mubr.f32.mxu0 0.0
    %2432 = vmatmul.mubr.f32.gmra.mxu0 %v2306
    %v2433 = vpop.f32.mrf.mxu0
    %v2434 = vadd.f32 %v2288, %v2433
    %v2435 = vpop.f32.mrf.mxu0
    %2436 = vmatprep.mubr.f32.mxu0 0.0
    %2437 = vmatmul.mubr.f32.gmra.mxu0 %v2309
    %v2438 = vpop.f32.mrf.mxu0
    %v2439 = vadd.f32 %v2288, %v2438
    %v2440 = vpop.f32.mrf.mxu0
    %2441 = vmatprep.mubr.f32.mxu0 0.0
    %2442 = vmatmul.mubr.f32.gmra.mxu0 %v2312
    %v2443 = vpop.f32.mrf.mxu0
    %v2444 = vadd.f32 %v2288, %v2443
    %v2445 = vpop.f32.mrf.mxu0
    %2446 = vmatprep.mubr.f32.mxu0 0.0
    %2447 = vmatmul.mubr.f32.gmra.mxu0 %v2315
    %v2448 = vpop.f32.mrf.mxu0
    %v2449 = vadd.f32 %v2288, %v2448
    %v2450 = vpop.f32.mrf.mxu0
    %2451 = vmatprep.mubr.f32.mxu0 0.0
    %2452 = vmatmul.mubr.f32.gmra.mxu0 %v2318
    %v2453 = vpop.f32.mrf.mxu0
    %v2454 = vadd.f32 %v2288, %v2453
    %v2455 = vpop.f32.mrf.mxu0
    %2456 = vmatprep.mubr.f32.mxu0 0.0
    %2457 = vmatmul.mubr.f32.gmra.mxu0 %v2321
    %v2458 = vpop.f32.mrf.mxu0
    %v2459 = vadd.f32 %v2288, %v2458
    %v2460 = vpop.f32.mrf.mxu0
    %2461 = vmatprep.mubr.f32.mxu0 0.0
    %2462 = vmatmul.mubr.f32.gmra.mxu0 %v2324
    %v2463 = vpop.f32.mrf.mxu0
    %v2464 = vadd.f32 %v2288, %v2463
    %v2465 = vpop.f32.mrf.mxu0
    %2466 = vmatprep.mubr.f32.mxu0 0.0
    %2467 = vmatmul.mubr.f32.gmra.mxu0 %v2327
    %v2468 = vpop.f32.mrf.mxu0
    %v2469 = vadd.f32 %v2288, %v2468
    %v2470 = vpop.f32.mrf.mxu0
    %2471 = vmatprep.mubr.f32.mxu0 0.0
    %2472 = vmatmul.mubr.f32.gmra.mxu0 %v2330
    %v2473 = vpop.f32.mrf.mxu0
    %v2474 = vadd.f32 %v2288, %v2473
    %v2475 = vpop.f32.mrf.mxu0
    %2476 = vmatprep.mubr.f32.mxu0 0.0
    %2477 = vmatmul.mubr.f32.gmra.mxu0 %v2333
    %v2478 = vpop.f32.mrf.mxu0
    %v2479 = vadd.f32 %v2288, %v2478
    %v2480 = vpop.f32.mrf.mxu0
    %2481 = vmatprep.mubr.f32.mxu0 0.0
    %2482 = vmatmul.mubr.f32.gmra.mxu0 %v2336
    %v2483 = vpop.f32.mrf.mxu0
    %v2484 = vadd.f32 %v2288, %v2483
    %v2485 = vpop.f32.mrf.mxu0
    %2486 = vdwg.mxu0
    %v2487 = vmax.f32 %v2409, 0.0
    %v2488 = vmax.f32 %v2414, 0.0
    %v2489 = vmax.f32 %v2419, 0.0
    %v2490 = vmax.f32 %v2424, 0.0
    %v2491 = vmax.f32 %v2429, 0.0
    %v2492 = vmax.f32 %v2434, 0.0
    %v2493 = vmax.f32 %v2439, 0.0
    %v2494 = vmax.f32 %v2444, 0.0
    %v2495 = vmax.f32 %v2449, 0.0
    %v2496 = vmax.f32 %v2454, 0.0
    %v2497 = vmax.f32 %v2459, 0.0
    %v2498 = vmax.f32 %v2464, 0.0
    %v2499 = vmax.f32 %v2469, 0.0
    %v2500 = vmax.f32 %v2474, 0.0
    %v2501 = vmax.f32 %v2479, 0.0
    %v2502 = vmax.f32 %v2484, 0.0
    %v2503 = vld [vmem:[#allocation2 + $0x228] sm:$0xff]
    %v2504 = vld [vmem:[#allocation2 + $0x230] sm:$0xff]
    %v2505 = vld [vmem:[#allocation2 + $0x238] sm:$0x1]
    %v2506 = vlaneseq
    %v2507 = vshrl.u32 %v2506, 7
    %v2508 = vsub.s32 0, %v2507
    %v2509 = vrot.slane %v2505, %v2508
    %v2510 = vsel %vm1162, %v1469, 0
    %v2512 = vsel %vm1162, %v1470, 0
    %v2514 = vsel %vm1162, %v1471, 0
    %v2516 = vsel %vm1162, %v1472, 0
    %v2518 = vsel %vm1162, %v1473, 0
    %v2520 = vsel %vm1162, %v1474, 0
    %v2522 = vsel %vm1162, %v1475, 0
    %v2524 = vsel %vm1162, %v1476, 0
    %v2526 = vsel %vm1162, %v1477, 0
    %v2528 = vsel %vm1162, %v1478, 0
    %v2530 = vsel %vm1162, %v1479, 0
    %v2532 = vsel %vm1162, %v1480, 0
    %v2534 = vsel %vm1162, %v1481, 0
    %v2536 = vsel %vm1162, %v1482, 0
    %v2538 = vsel %vm1162, %v1483, 0
    %v2540 = vsel %vm1162, %v1484, 0
    %2542 = vmatprep.subr.mxu0 0.0
    %2543 = vmatpush1.msra.mxu0 0.0
    %2544 = vmatprep.subr.mxu0 0.0
    %2545 = vmatpush1.msra.mxu0 0.0
    %2546 = vmatprep.subr.mxu0 0.0
    %2547 = vmatpush1.msra.mxu0 0.0
    %2548 = vmatprep.subr.mxu0 0.0
    %2549 = vmatpush1.msra.mxu0 0.0
    %2550 = vmatprep.subr.mxu0 0.0
    %2551 = vmatpush1.msra.mxu0 0.0
    %2552 = vmatprep.subr.mxu0 0.0
    %2553 = vmatpush1.msra.mxu0 0.0
    %2554 = vmatprep.subr.mxu0 0.0
    %2555 = vmatpush1.msra.mxu0 0.0
    %2556 = vmatprep.subr.mxu0 0.0
    %2557 = vmatpush1.msra.mxu0 0.0
    %2558 = vmatprep.subr.mxu0 0.0
    %2559 = vmatpush1.msra.mxu0 0.0
    %2560 = vmatprep.subr.mxu0 0.0
    %2561 = vmatpush1.msra.mxu0 0.0
    %2562 = vmatprep.subr.mxu0 0.0
    %2563 = vmatpush1.msra.mxu0 0.0
    %2564 = vmatprep.subr.mxu0 0.0
    %2565 = vmatpush1.msra.mxu0 0.0
    %2566 = vmatprep.subr.mxu0 0.0
    %2567 = vmatpush1.msra.mxu0 0.0
    %2568 = vmatprep.subr.mxu0 0.0
    %2569 = vmatpush1.msra.mxu0 0.0
    %2570 = vmatprep.subr.mxu0 0.0
    %2571 = vmatpush1.msra.mxu0 %v2504
    %2572 = vmatprep.subr.mxu0 0.0
    %2573 = vmatpush1.msra.mxu0 %v2503
    %2574 = vmatprep.subr.mxu0 0.0
    %2575 = vmatpush2.msra.mxu0 0.0
    %2576 = vmatprep.subr.mxu0 0.0
    %2577 = vmatpush2.msra.mxu0 0.0
    %2578 = vmatprep.subr.mxu0 0.0
    %2579 = vmatpush2.msra.mxu0 0.0
    %2580 = vmatprep.subr.mxu0 0.0
    %2581 = vmatpush2.msra.mxu0 0.0
    %2582 = vmatprep.subr.mxu0 0.0
    %2583 = vmatpush2.msra.mxu0 0.0
    %2584 = vmatprep.subr.mxu0 0.0
    %2585 = vmatpush2.msra.mxu0 0.0
    %2586 = vmatprep.subr.mxu0 0.0
    %2587 = vmatpush2.msra.mxu0 0.0
    %2588 = vmatprep.subr.mxu0 0.0
    %2589 = vmatpush2.msra.mxu0 0.0
    %2590 = vmatprep.subr.mxu0 0.0
    %2591 = vmatpush2.msra.mxu0 0.0
    %2592 = vmatprep.subr.mxu0 0.0
    %2593 = vmatpush2.msra.mxu0 0.0
    %2594 = vmatprep.subr.mxu0 0.0
    %2595 = vmatpush2.msra.mxu0 0.0
    %2596 = vmatprep.subr.mxu0 0.0
    %2597 = vmatpush2.msra.mxu0 0.0
    %2598 = vmatprep.subr.mxu0 0.0
    %2599 = vmatpush2.msra.mxu0 0.0
    %2600 = vmatprep.subr.mxu0 0.0
    %2601 = vmatpush2.msra.mxu0 0.0
    %2602 = vmatprep.subr.mxu0 0.0
    %2603 = vmatpush2.msra.mxu0 0.0
    %2604 = vmatprep.subr.mxu0 0.0
    %2605 = vmatpush2.msra.mxu0 0.0
    %2606 = vmatprep.mubr.f32.mxu0 0.0
    %2607 = vmatmul.mubr.f32.gmra.mxu0 %v2510
    %v2608 = vpop.f32.mrf.mxu0
    %v2609 = vadd.f32 %v2509, %v2608
    %v2610 = vpop.f32.mrf.mxu0
    %2611 = vmatprep.mubr.f32.mxu0 0.0
    %2612 = vmatmul.mubr.f32.gmra.mxu0 %v2512
    %v2613 = vpop.f32.mrf.mxu0
    %v2614 = vadd.f32 %v2509, %v2613
    %v2615 = vpop.f32.mrf.mxu0
    %2616 = vmatprep.mubr.f32.mxu0 0.0
    %2617 = vmatmul.mubr.f32.gmra.mxu0 %v2514
    %v2618 = vpop.f32.mrf.mxu0
    %v2619 = vadd.f32 %v2509, %v2618
    %v2620 = vpop.f32.mrf.mxu0
    %2621 = vmatprep.mubr.f32.mxu0 0.0
    %2622 = vmatmul.mubr.f32.gmra.mxu0 %v2516
    %v2623 = vpop.f32.mrf.mxu0
    %v2624 = vadd.f32 %v2509, %v2623
    %v2625 = vpop.f32.mrf.mxu0
    %2626 = vmatprep.mubr.f32.mxu0 0.0
    %2627 = vmatmul.mubr.f32.gmra.mxu0 %v2518
    %v2628 = vpop.f32.mrf.mxu0
    %v2629 = vadd.f32 %v2509, %v2628
    %v2630 = vpop.f32.mrf.mxu0
    %2631 = vmatprep.mubr.f32.mxu0 0.0
    %2632 = vmatmul.mubr.f32.gmra.mxu0 %v2520
    %v2633 = vpop.f32.mrf.mxu0
    %v2634 = vadd.f32 %v2509, %v2633
    %v2635 = vpop.f32.mrf.mxu0
    %2636 = vmatprep.mubr.f32.mxu0 0.0
    %2637 = vmatmul.mubr.f32.gmra.mxu0 %v2522
    %v2638 = vpop.f32.mrf.mxu0
    %v2639 = vadd.f32 %v2509, %v2638
    %v2640 = vpop.f32.mrf.mxu0
    %2641 = vmatprep.mubr.f32.mxu0 0.0
    %2642 = vmatmul.mubr.f32.gmra.mxu0 %v2524
    %v2643 = vpop.f32.mrf.mxu0
    %v2644 = vadd.f32 %v2509, %v2643
    %v2645 = vpop.f32.mrf.mxu0
    %2646 = vmatprep.mubr.f32.mxu0 0.0
    %2647 = vmatmul.mubr.f32.gmra.mxu0 %v2526
    %v2648 = vpop.f32.mrf.mxu0
    %v2649 = vadd.f32 %v2509, %v2648
    %v2650 = vpop.f32.mrf.mxu0
    %2651 = vmatprep.mubr.f32.mxu0 0.0
    %2652 = vmatmul.mubr.f32.gmra.mxu0 %v2528
    %v2653 = vpop.f32.mrf.mxu0
    %v2654 = vadd.f32 %v2509, %v2653
    %v2655 = vpop.f32.mrf.mxu0
    %2656 = vmatprep.mubr.f32.mxu0 0.0
    %2657 = vmatmul.mubr.f32.gmra.mxu0 %v2530
    %v2658 = vpop.f32.mrf.mxu0
    %v2659 = vadd.f32 %v2509, %v2658
    %v2660 = vpop.f32.mrf.mxu0
    %2661 = vmatprep.mubr.f32.mxu0 0.0
    %2662 = vmatmul.mubr.f32.gmra.mxu0 %v2532
    %v2663 = vpop.f32.mrf.mxu0
    %v2664 = vadd.f32 %v2509, %v2663
    %v2665 = vpop.f32.mrf.mxu0
    %2666 = vmatprep.mubr.f32.mxu0 0.0
    %2667 = vmatmul.mubr.f32.gmra.mxu0 %v2534
    %v2668 = vpop.f32.mrf.mxu0
    %v2669 = vadd.f32 %v2509, %v2668
    %v2670 = vpop.f32.mrf.mxu0
    %2671 = vmatprep.mubr.f32.mxu0 0.0
    %2672 = vmatmul.mubr.f32.gmra.mxu0 %v2536
    %v2673 = vpop.f32.mrf.mxu0
    %v2674 = vadd.f32 %v2509, %v2673
    %v2675 = vpop.f32.mrf.mxu0
    %2676 = vmatprep.mubr.f32.mxu0 0.0
    %2677 = vmatmul.mubr.f32.gmra.mxu0 %v2538
    %v2678 = vpop.f32.mrf.mxu0
    %v2679 = vadd.f32 %v2509, %v2678
    %v2680 = vpop.f32.mrf.mxu0
    %2681 = vmatprep.mubr.f32.mxu0 0.0
    %2682 = vmatmul.mubr.f32.gmra.mxu0 %v2540
    %v2683 = vpop.f32.mrf.mxu0
    %v2684 = vadd.f32 %v2509, %v2683
    %v2685 = vpop.f32.mrf.mxu0
    %2686 = vdwg.mxu0
    %v2687 = vadd.f32 %v2487, %v2609
    %v2688 = vadd.f32 %v2488, %v2614
    %v2689 = vadd.f32 %v2489, %v2619
    %v2690 = vadd.f32 %v2490, %v2624
    %v2691 = vadd.f32 %v2491, %v2629
    %v2692 = vadd.f32 %v2492, %v2634
    %v2693 = vadd.f32 %v2493, %v2639
    %v2694 = vadd.f32 %v2494, %v2644
    %v2695 = vadd.f32 %v2495, %v2649
    %v2696 = vadd.f32 %v2496, %v2654
    %v2697 = vadd.f32 %v2497, %v2659
    %v2698 = vadd.f32 %v2498, %v2664
    %v2699 = vadd.f32 %v2499, %v2669
    %v2700 = vadd.f32 %v2500, %v2674
    %v2701 = vadd.f32 %v2501, %v2679
    %v2702 = vadd.f32 %v2502, %v2684
    %v2703 = vmax.f32 %v2687, 0.0
    %v2704 = vmax.f32 %v2688, 0.0
    %v2705 = vmax.f32 %v2689, 0.0
    %v2706 = vmax.f32 %v2690, 0.0
    %v2707 = vmax.f32 %v2691, 0.0
    %v2708 = vmax.f32 %v2692, 0.0
    %v2709 = vmax.f32 %v2693, 0.0
    %v2710 = vmax.f32 %v2694, 0.0
    %v2711 = vmax.f32 %v2695, 0.0
    %v2712 = vmax.f32 %v2696, 0.0
    %v2713 = vmax.f32 %v2697, 0.0
    %v2714 = vmax.f32 %v2698, 0.0
    %v2715 = vmax.f32 %v2699, 0.0
    %v2716 = vmax.f32 %v2700, 0.0
    %v2717 = vmax.f32 %v2701, 0.0
    %v2718 = vmax.f32 %v2702, 0.0
    %v2719 = vld [vmem:[#allocation2 + $0x240] sm:$0xff]
    %v2720 = vld [vmem:[#allocation2 + $0x248] sm:$0x1]
    %v2721 = vlaneseq
    %v2722 = vshrl.u32 %v2721, 7
    %v2723 = vsub.s32 0, %v2722
    %v2724 = vrot.slane %v2720, %v2723
    %2725 = vrot.lane.b32.xlu0 %v38, 96
    %v2726 = vpop.permute.xlu0 %2725
    %vm2727 = vcmask 64512
    %v2728 = vsel %vm2727, %v2726, 0
    %2730 = vmatprep.subr.mxu0 0.0
    %2731 = vmatpush1.msra.mxu0 0.0
    %2732 = vmatprep.subr.mxu0 0.0
    %2733 = vmatpush1.msra.mxu0 0.0
    %2734 = vmatprep.subr.mxu0 0.0
    %2735 = vmatpush1.msra.mxu0 0.0
    %2736 = vmatprep.subr.mxu0 0.0
    %2737 = vmatpush1.msra.mxu0 0.0
    %2738 = vmatprep.subr.mxu0 0.0
    %2739 = vmatpush1.msra.mxu0 0.0
    %2740 = vmatprep.subr.mxu0 0.0
    %2741 = vmatpush1.msra.mxu0 0.0
    %2742 = vmatprep.subr.mxu0 0.0
    %2743 = vmatpush1.msra.mxu0 0.0
    %2744 = vmatprep.subr.mxu0 0.0
    %2745 = vmatpush1.msra.mxu0 0.0
    %2746 = vmatprep.subr.mxu0 0.0
    %2747 = vmatpush1.msra.mxu0 0.0
    %2748 = vmatprep.subr.mxu0 0.0
    %2749 = vmatpush1.msra.mxu0 0.0
    %2750 = vmatprep.subr.mxu0 0.0
    %2751 = vmatpush1.msra.mxu0 0.0
    %2752 = vmatprep.subr.mxu0 0.0
    %2753 = vmatpush1.msra.mxu0 0.0
    %2754 = vmatprep.subr.mxu0 0.0
    %2755 = vmatpush1.msra.mxu0 0.0
    %2756 = vmatprep.subr.mxu0 0.0
    %2757 = vmatpush1.msra.mxu0 0.0
    %2758 = vmatprep.subr.mxu0 0.0
    %2759 = vmatpush1.msra.mxu0 0.0
    %2760 = vmatprep.subr.mxu0 0.0
    %2761 = vmatpush1.msra.mxu0 %v2719
    %2762 = vmatprep.subr.mxu0 0.0
    %2763 = vmatpush2.msra.mxu0 0.0
    %2764 = vmatprep.subr.mxu0 0.0
    %2765 = vmatpush2.msra.mxu0 0.0
    %2766 = vmatprep.subr.mxu0 0.0
    %2767 = vmatpush2.msra.mxu0 0.0
    %2768 = vmatprep.subr.mxu0 0.0
    %2769 = vmatpush2.msra.mxu0 0.0
    %2770 = vmatprep.subr.mxu0 0.0
    %2771 = vmatpush2.msra.mxu0 0.0
    %2772 = vmatprep.subr.mxu0 0.0
    %2773 = vmatpush2.msra.mxu0 0.0
    %2774 = vmatprep.subr.mxu0 0.0
    %2775 = vmatpush2.msra.mxu0 0.0
    %2776 = vmatprep.subr.mxu0 0.0
    %2777 = vmatpush2.msra.mxu0 0.0
    %2778 = vmatprep.subr.mxu0 0.0
    %2779 = vmatpush2.msra.mxu0 0.0
    %2780 = vmatprep.subr.mxu0 0.0
    %2781 = vmatpush2.msra.mxu0 0.0
    %2782 = vmatprep.subr.mxu0 0.0
    %2783 = vmatpush2.msra.mxu0 0.0
    %2784 = vmatprep.subr.mxu0 0.0
    %2785 = vmatpush2.msra.mxu0 0.0
    %2786 = vmatprep.subr.mxu0 0.0
    %2787 = vmatpush2.msra.mxu0 0.0
    %2788 = vmatprep.subr.mxu0 0.0
    %2789 = vmatpush2.msra.mxu0 0.0
    %2790 = vmatprep.subr.mxu0 0.0
    %2791 = vmatpush2.msra.mxu0 0.0
    %2792 = vmatprep.subr.mxu0 0.0
    %2793 = vmatpush2.msra.mxu0 0.0
    %2794 = vmatprep.mubr.f32.mxu0 0.0
    %2795 = vmatmul.mubr.f32.gmra.mxu0 %v2728
    %v2796 = vpop.f32.mrf.mxu0
    %v2797 = vadd.f32 %v2724, %v2796
    %v2798 = vpop.f32.mrf.mxu0
    %2799 = vdwg.mxu0
    %v2800 = vmul.f32 %v2797, 0.01
    %v2801 = vmax.f32 %v2797, %v2800
    %v2802 = vld [vmem:[#allocation2 + $0x250] sm:$0xff]
    %v2803 = vld [vmem:[#allocation2 + $0x258] sm:$0xff]
    %v2804 = vld [vmem:[#allocation2 + $0x260] sm:$0x1]
    %v2805 = vlaneseq
    %v2806 = vshrl.u32 %v2805, 7
    %v2807 = vsub.s32 0, %v2806
    %v2808 = vrot.slane %v2804, %v2807
    %v2810 = vsel %vm1162, %v2801, 0
    %2812 = vmatprep.subr.mxu0 0.0
    %2813 = vmatpush1.msra.mxu0 0.0
    %2814 = vmatprep.subr.mxu0 0.0
    %2815 = vmatpush1.msra.mxu0 0.0
    %2816 = vmatprep.subr.mxu0 0.0
    %2817 = vmatpush1.msra.mxu0 0.0
    %2818 = vmatprep.subr.mxu0 0.0
    %2819 = vmatpush1.msra.mxu0 0.0
    %2820 = vmatprep.subr.mxu0 0.0
    %2821 = vmatpush1.msra.mxu0 0.0
    %2822 = vmatprep.subr.mxu0 0.0
    %2823 = vmatpush1.msra.mxu0 0.0
    %2824 = vmatprep.subr.mxu0 0.0
    %2825 = vmatpush1.msra.mxu0 0.0
    %2826 = vmatprep.subr.mxu0 0.0
    %2827 = vmatpush1.msra.mxu0 0.0
    %2828 = vmatprep.subr.mxu0 0.0
    %2829 = vmatpush1.msra.mxu0 0.0
    %2830 = vmatprep.subr.mxu0 0.0
    %2831 = vmatpush1.msra.mxu0 0.0
    %2832 = vmatprep.subr.mxu0 0.0
    %2833 = vmatpush1.msra.mxu0 0.0
    %2834 = vmatprep.subr.mxu0 0.0
    %2835 = vmatpush1.msra.mxu0 0.0
    %2836 = vmatprep.subr.mxu0 0.0
    %2837 = vmatpush1.msra.mxu0 0.0
    %2838 = vmatprep.subr.mxu0 0.0
    %2839 = vmatpush1.msra.mxu0 0.0
    %2840 = vmatprep.subr.mxu0 0.0
    %2841 = vmatpush1.msra.mxu0 %v2803
    %2842 = vmatprep.subr.mxu0 0.0
    %2843 = vmatpush1.msra.mxu0 %v2802
    %2844 = vmatprep.subr.mxu0 0.0
    %2845 = vmatpush2.msra.mxu0 0.0
    %2846 = vmatprep.subr.mxu0 0.0
    %2847 = vmatpush2.msra.mxu0 0.0
    %2848 = vmatprep.subr.mxu0 0.0
    %2849 = vmatpush2.msra.mxu0 0.0
    %2850 = vmatprep.subr.mxu0 0.0
    %2851 = vmatpush2.msra.mxu0 0.0
    %2852 = vmatprep.subr.mxu0 0.0
    %2853 = vmatpush2.msra.mxu0 0.0
    %2854 = vmatprep.subr.mxu0 0.0
    %2855 = vmatpush2.msra.mxu0 0.0
    %2856 = vmatprep.subr.mxu0 0.0
    %2857 = vmatpush2.msra.mxu0 0.0
    %2858 = vmatprep.subr.mxu0 0.0
    %2859 = vmatpush2.msra.mxu0 0.0
    %2860 = vmatprep.subr.mxu0 0.0
    %2861 = vmatpush2.msra.mxu0 0.0
    %2862 = vmatprep.subr.mxu0 0.0
    %2863 = vmatpush2.msra.mxu0 0.0
    %2864 = vmatprep.subr.mxu0 0.0
    %2865 = vmatpush2.msra.mxu0 0.0
    %2866 = vmatprep.subr.mxu0 0.0
    %2867 = vmatpush2.msra.mxu0 0.0
    %2868 = vmatprep.subr.mxu0 0.0
    %2869 = vmatpush2.msra.mxu0 0.0
    %2870 = vmatprep.subr.mxu0 0.0
    %2871 = vmatpush2.msra.mxu0 0.0
    %2872 = vmatprep.subr.mxu0 0.0
    %2873 = vmatpush2.msra.mxu0 0.0
    %2874 = vmatprep.subr.mxu0 0.0
    %2875 = vmatpush2.msra.mxu0 0.0
    %2876 = vmatprep.mubr.f32.mxu0 0.0
    %2877 = vmatmul.mubr.f32.gmra.mxu0 %v2810
    %v2878 = vpop.f32.mrf.mxu0
    %v2879 = vadd.f32 %v2808, %v2878
    %v2880 = vpop.f32.mrf.mxu0
    %2881 = vdwg.mxu0
    %v2882 = vmul.f32 %v2879, 0.01
    %v2883 = vmax.f32 %v2879, %v2882
    %v2884 = vld [vmem:[#allocation2 + $0x268] sm:$0xff]
    %v2885 = vld [vmem:[#allocation2 + $0x270] sm:$0xff]
    %v2886 = vld [vmem:[#allocation2 + $0x278] sm:$0xff]
    %v2887 = vld [vmem:[#allocation2 + $0x280] sm:$0xff]
    %v2888 = vld [vmem:[#allocation2 + $0x288] sm:$0xff]
    %v2889 = vld [vmem:[#allocation2 + $0x290] sm:$0xff]
    %v2890 = vld [vmem:[#allocation2 + $0x298] sm:$0xff]
    %v2891 = vld [vmem:[#allocation2 + $0x2a0] sm:$0xff]
    %2893 = vset.pattern.permute.xlu0 0
    %2894 = vperm.xlu0 %2893, %v2703
    %v2895 = vpop.permute.xlu0 %2894
    %2898 = vset.pattern.permute.xlu0 0
    %2899 = vperm.xlu0 %2898, %v2704
    %v2900 = vpop.permute.xlu0 %2899
    %2903 = vset.pattern.permute.xlu0 0
    %2904 = vperm.xlu0 %2903, %v2705
    %v2905 = vpop.permute.xlu0 %2904
    %2908 = vset.pattern.permute.xlu0 0
    %2909 = vperm.xlu0 %2908, %v2706
    %v2910 = vpop.permute.xlu0 %2909
    %2913 = vset.pattern.permute.xlu0 0
    %2914 = vperm.xlu0 %2913, %v2707
    %v2915 = vpop.permute.xlu0 %2914
    %2918 = vset.pattern.permute.xlu0 0
    %2919 = vperm.xlu0 %2918, %v2708
    %v2920 = vpop.permute.xlu0 %2919
    %2923 = vset.pattern.permute.xlu0 0
    %2924 = vperm.xlu0 %2923, %v2709
    %v2925 = vpop.permute.xlu0 %2924
    %2928 = vset.pattern.permute.xlu0 0
    %2929 = vperm.xlu0 %2928, %v2710
    %v2930 = vpop.permute.xlu0 %2929
    %2933 = vset.pattern.permute.xlu0 0
    %2934 = vperm.xlu0 %2933, %v2711
    %v2935 = vpop.permute.xlu0 %2934
    %2938 = vset.pattern.permute.xlu0 0
    %2939 = vperm.xlu0 %2938, %v2712
    %v2940 = vpop.permute.xlu0 %2939
    %2943 = vset.pattern.permute.xlu0 0
    %2944 = vperm.xlu0 %2943, %v2713
    %v2945 = vpop.permute.xlu0 %2944
    %2948 = vset.pattern.permute.xlu0 0
    %2949 = vperm.xlu0 %2948, %v2714
    %v2950 = vpop.permute.xlu0 %2949
    %2953 = vset.pattern.permute.xlu0 0
    %2954 = vperm.xlu0 %2953, %v2715
    %v2955 = vpop.permute.xlu0 %2954
    %2958 = vset.pattern.permute.xlu0 0
    %2959 = vperm.xlu0 %2958, %v2716
    %v2960 = vpop.permute.xlu0 %2959
    %2963 = vset.pattern.permute.xlu0 0
    %2964 = vperm.xlu0 %2963, %v2717
    %v2965 = vpop.permute.xlu0 %2964
    %2968 = vset.pattern.permute.xlu0 0
    %2969 = vperm.xlu0 %2968, %v2718
    %v2970 = vpop.permute.xlu0 %2969
    %v2972 = vmul.f32 %v2895, %v2884
    %v2973 = vmul.f32 %v2900, %v2885
    %v2974 = vmul.f32 %v2905, %v2886
    %v2975 = vmul.f32 %v2910, %v2887
    %v2976 = vmul.f32 %v2915, %v2884
    %v2977 = vmul.f32 %v2920, %v2885
    %v2978 = vmul.f32 %v2925, %v2886
    %v2979 = vmul.f32 %v2930, %v2887
    %v2980 = vmul.f32 %v2935, %v2884
    %v2981 = vmul.f32 %v2940, %v2885
    %v2982 = vmul.f32 %v2945, %v2886
    %v2983 = vmul.f32 %v2950, %v2887
    %v2984 = vmul.f32 %v2955, %v2884
    %v2985 = vmul.f32 %v2960, %v2885
    %v2986 = vmul.f32 %v2965, %v2886
    %v2987 = vmul.f32 %v2970, %v2887
    %2988 = vset.pattern.permute.xlu0 1
    %2989 = vperm.xlu0 %2988, %v2703
    %v2990 = vpop.permute.xlu0 %2989
    %2992 = vset.pattern.permute.xlu0 1
    %2993 = vperm.xlu0 %2992, %v2704
    %v2994 = vpop.permute.xlu0 %2993
    %2996 = vset.pattern.permute.xlu0 1
    %2997 = vperm.xlu0 %2996, %v2705
    %v2998 = vpop.permute.xlu0 %2997
    %3000 = vset.pattern.permute.xlu0 1
    %3001 = vperm.xlu0 %3000, %v2706
    %v3002 = vpop.permute.xlu0 %3001
    %3004 = vset.pattern.permute.xlu0 1
    %3005 = vperm.xlu0 %3004, %v2707
    %v3006 = vpop.permute.xlu0 %3005
    %3008 = vset.pattern.permute.xlu0 1
    %3009 = vperm.xlu0 %3008, %v2708
    %v3010 = vpop.permute.xlu0 %3009
    %3012 = vset.pattern.permute.xlu0 1
    %3013 = vperm.xlu0 %3012, %v2709
    %v3014 = vpop.permute.xlu0 %3013
    %3016 = vset.pattern.permute.xlu0 1
    %3017 = vperm.xlu0 %3016, %v2710
    %v3018 = vpop.permute.xlu0 %3017
    %3020 = vset.pattern.permute.xlu0 1
    %3021 = vperm.xlu0 %3020, %v2711
    %v3022 = vpop.permute.xlu0 %3021
    %3024 = vset.pattern.permute.xlu0 1
    %3025 = vperm.xlu0 %3024, %v2712
    %v3026 = vpop.permute.xlu0 %3025
    %3028 = vset.pattern.permute.xlu0 1
    %3029 = vperm.xlu0 %3028, %v2713
    %v3030 = vpop.permute.xlu0 %3029
    %3032 = vset.pattern.permute.xlu0 1
    %3033 = vperm.xlu0 %3032, %v2714
    %v3034 = vpop.permute.xlu0 %3033
    %3036 = vset.pattern.permute.xlu0 1
    %3037 = vperm.xlu0 %3036, %v2715
    %v3038 = vpop.permute.xlu0 %3037
    %3040 = vset.pattern.permute.xlu0 1
    %3041 = vperm.xlu0 %3040, %v2716
    %v3042 = vpop.permute.xlu0 %3041
    %3044 = vset.pattern.permute.xlu0 1
    %3045 = vperm.xlu0 %3044, %v2717
    %v3046 = vpop.permute.xlu0 %3045
    %3048 = vset.pattern.permute.xlu0 1
    %3049 = vperm.xlu0 %3048, %v2718
    %v3050 = vpop.permute.xlu0 %3049
    %v3052 = vmul.f32 %v2990, %v2888
    %v3053 = vmul.f32 %v2994, %v2889
    %v3054 = vmul.f32 %v2998, %v2890
    %v3055 = vmul.f32 %v3002, %v2891
    %v3056 = vmul.f32 %v3006, %v2888
    %v3057 = vmul.f32 %v3010, %v2889
    %v3058 = vmul.f32 %v3014, %v2890
    %v3059 = vmul.f32 %v3018, %v2891
    %v3060 = vmul.f32 %v3022, %v2888
    %v3061 = vmul.f32 %v3026, %v2889
    %v3062 = vmul.f32 %v3030, %v2890
    %v3063 = vmul.f32 %v3034, %v2891
    %v3064 = vmul.f32 %v3038, %v2888
    %v3065 = vmul.f32 %v3042, %v2889
    %v3066 = vmul.f32 %v3046, %v2890
    %v3067 = vmul.f32 %v3050, %v2891
    %v3068 = vadd.f32 %v2972, %v3052
    %v3069 = vadd.f32 %v2973, %v3053
    %v3070 = vadd.f32 %v2974, %v3054
    %v3071 = vadd.f32 %v2975, %v3055
    %v3072 = vadd.f32 %v2976, %v3056
    %v3073 = vadd.f32 %v2977, %v3057
    %v3074 = vadd.f32 %v2978, %v3058
    %v3075 = vadd.f32 %v2979, %v3059
    %v3076 = vadd.f32 %v2980, %v3060
    %v3077 = vadd.f32 %v2981, %v3061
    %v3078 = vadd.f32 %v2982, %v3062
    %v3079 = vadd.f32 %v2983, %v3063
    %v3080 = vadd.f32 %v2984, %v3064
    %v3081 = vadd.f32 %v2985, %v3065
    %v3082 = vadd.f32 %v2986, %v3066
    %v3083 = vadd.f32 %v2987, %v3067
    %v3084 = vld [vmem:[#allocation2 + $0x180] sm:$0xf]
    %v3085 = vld [vmem:[#allocation2 + $0x2a8] sm:$0xff]
    %v3086 = vld [vmem:[#allocation2 + $0x2b0] sm:$0xff]
    %v3088 = vsel %vm1162, %v2883, 0
    %3090 = vmatprep.subr.mxu0 0.0
    %3091 = vmatpush1.msra.mxu0 0.0
    %3092 = vmatprep.subr.mxu0 0.0
    %3093 = vmatpush1.msra.mxu0 0.0
    %3094 = vmatprep.subr.mxu0 0.0
    %3095 = vmatpush1.msra.mxu0 0.0
    %3096 = vmatprep.subr.mxu0 0.0
    %3097 = vmatpush1.msra.mxu0 0.0
    %3098 = vmatprep.subr.mxu0 0.0
    %3099 = vmatpush1.msra.mxu0 0.0
    %3100 = vmatprep.subr.mxu0 0.0
    %3101 = vmatpush1.msra.mxu0 0.0
    %3102 = vmatprep.subr.mxu0 0.0
    %3103 = vmatpush1.msra.mxu0 0.0
    %3104 = vmatprep.subr.mxu0 0.0
    %3105 = vmatpush1.msra.mxu0 0.0
    %3106 = vmatprep.subr.mxu0 0.0
    %3107 = vmatpush1.msra.mxu0 0.0
    %3108 = vmatprep.subr.mxu0 0.0
    %3109 = vmatpush1.msra.mxu0 0.0
    %3110 = vmatprep.subr.mxu0 0.0
    %3111 = vmatpush1.msra.mxu0 0.0
    %3112 = vmatprep.subr.mxu0 0.0
    %3113 = vmatpush1.msra.mxu0 0.0
    %3114 = vmatprep.subr.mxu0 0.0
    %3115 = vmatpush1.msra.mxu0 0.0
    %3116 = vmatprep.subr.mxu0 0.0
    %3117 = vmatpush1.msra.mxu0 0.0
    %3118 = vmatprep.subr.mxu0 0.0
    %3119 = vmatpush1.msra.mxu0 %v3086
    %3120 = vmatprep.subr.mxu0 0.0
    %3121 = vmatpush1.msra.mxu0 %v3085
    %3122 = vmatprep.subr.mxu0 0.0
    %3123 = vmatpush2.msra.mxu0 0.0
    %3124 = vmatprep.subr.mxu0 0.0
    %3125 = vmatpush2.msra.mxu0 0.0
    %3126 = vmatprep.subr.mxu0 0.0
    %3127 = vmatpush2.msra.mxu0 0.0
    %3128 = vmatprep.subr.mxu0 0.0
    %3129 = vmatpush2.msra.mxu0 0.0
    %3130 = vmatprep.subr.mxu0 0.0
    %3131 = vmatpush2.msra.mxu0 0.0
    %3132 = vmatprep.subr.mxu0 0.0
    %3133 = vmatpush2.msra.mxu0 0.0
    %3134 = vmatprep.subr.mxu0 0.0
    %3135 = vmatpush2.msra.mxu0 0.0
    %3136 = vmatprep.subr.mxu0 0.0
    %3137 = vmatpush2.msra.mxu0 0.0
    %3138 = vmatprep.subr.mxu0 0.0
    %3139 = vmatpush2.msra.mxu0 0.0
    %3140 = vmatprep.subr.mxu0 0.0
    %3141 = vmatpush2.msra.mxu0 0.0
    %3142 = vmatprep.subr.mxu0 0.0
    %3143 = vmatpush2.msra.mxu0 0.0
    %3144 = vmatprep.subr.mxu0 0.0
    %3145 = vmatpush2.msra.mxu0 0.0
    %3146 = vmatprep.subr.mxu0 0.0
    %3147 = vmatpush2.msra.mxu0 0.0
    %3148 = vmatprep.subr.mxu0 0.0
    %3149 = vmatpush2.msra.mxu0 0.0
    %3150 = vmatprep.subr.mxu0 0.0
    %3151 = vmatpush2.msra.mxu0 0.0
    %3152 = vmatprep.subr.mxu0 0.0
    %3153 = vmatpush2.msra.mxu0 0.0
    %3154 = vmatprep.mubr.f32.mxu0 0.0
    %3155 = vmatmul.mubr.f32.gmra.mxu0 %v3088
    %v3156 = vpop.f32.mrf.mxu0
    %v3157 = vadd.f32 0.0, %v3156
    %v3158 = vpop.f32.mrf.mxu0
    %3159 = vdwg.mxu0
    %3160 = vmatprep.subr.mxu0 0.0
    %3161 = vmatpush1.msra.mxu0 %v3083
    %3162 = vmatprep.subr.mxu0 0.0
    %3163 = vmatpush1.msra.mxu0 %v3082
    %3164 = vmatprep.subr.mxu0 0.0
    %3165 = vmatpush1.msra.mxu0 %v3081
    %3166 = vmatprep.subr.mxu0 0.0
    %3167 = vmatpush1.msra.mxu0 %v3080
    %3168 = vmatprep.subr.mxu0 0.0
    %3169 = vmatpush1.msra.mxu0 %v3079
    %3170 = vmatprep.subr.mxu0 0.0
    %3171 = vmatpush1.msra.mxu0 %v3078
    %3172 = vmatprep.subr.mxu0 0.0
    %3173 = vmatpush1.msra.mxu0 %v3077
    %3174 = vmatprep.subr.mxu0 0.0
    %3175 = vmatpush1.msra.mxu0 %v3076
    %3176 = vmatprep.subr.mxu0 0.0
    %3177 = vmatpush1.msra.mxu0 %v3075
    %3178 = vmatprep.subr.mxu0 0.0
    %3179 = vmatpush1.msra.mxu0 %v3074
    %3180 = vmatprep.subr.mxu0 0.0
    %3181 = vmatpush1.msra.mxu0 %v3073
    %3182 = vmatprep.subr.mxu0 0.0
    %3183 = vmatpush1.msra.mxu0 %v3072
    %3184 = vmatprep.subr.mxu0 0.0
    %3185 = vmatpush1.msra.mxu0 %v3071
    %3186 = vmatprep.subr.mxu0 0.0
    %3187 = vmatpush1.msra.mxu0 %v3070
    %3188 = vmatprep.subr.mxu0 0.0
    %3189 = vmatpush1.msra.mxu0 %v3069
    %3190 = vmatprep.subr.mxu0 0.0
    %3191 = vmatpush1.msra.mxu0 %v3068
    %3192 = vmatprep.subr.mxu0 0.0
    %3193 = vmatpush2.msra.mxu0 0.0
    %3194 = vmatprep.subr.mxu0 0.0
    %3195 = vmatpush2.msra.mxu0 0.0
    %3196 = vmatprep.subr.mxu0 0.0
    %3197 = vmatpush2.msra.mxu0 0.0
    %3198 = vmatprep.subr.mxu0 0.0
    %3199 = vmatpush2.msra.mxu0 0.0
    %3200 = vmatprep.subr.mxu0 0.0
    %3201 = vmatpush2.msra.mxu0 0.0
    %3202 = vmatprep.subr.mxu0 0.0
    %3203 = vmatpush2.msra.mxu0 0.0
    %3204 = vmatprep.subr.mxu0 0.0
    %3205 = vmatpush2.msra.mxu0 0.0
    %3206 = vmatprep.subr.mxu0 0.0
    %3207 = vmatpush2.msra.mxu0 0.0
    %3208 = vmatprep.subr.mxu0 0.0
    %3209 = vmatpush2.msra.mxu0 0.0
    %3210 = vmatprep.subr.mxu0 0.0
    %3211 = vmatpush2.msra.mxu0 0.0
    %3212 = vmatprep.subr.mxu0 0.0
    %3213 = vmatpush2.msra.mxu0 0.0
    %3214 = vmatprep.subr.mxu0 0.0
    %3215 = vmatpush2.msra.mxu0 0.0
    %3216 = vmatprep.subr.mxu0 0.0
    %3217 = vmatpush2.msra.mxu0 0.0
    %3218 = vmatprep.subr.mxu0 0.0
    %3219 = vmatpush2.msra.mxu0 0.0
    %3220 = vmatprep.subr.mxu0 0.0
    %3221 = vmatpush2.msra.mxu0 0.0
    %3222 = vmatprep.subr.mxu0 0.0
    %3223 = vmatpush2.msra.mxu0 0.0
    %3224 = vmatprep.mubr.f32.mxu0 0.0
    %3225 = vmatmul.mubr.f32.gmra.mxu0 %v3084
    %v3226 = vpop.f32.mrf.mxu0
    %v3227 = vadd.f32 %v3157, %v3226
    %v3228 = vpop.f32.mrf.mxu0
    %3229 = vdwg.mxu0
    %v3230 = vld [vmem:[#allocation2 + $0x2b8] sm:$0x1]
    %v3231 = vlaneseq
    %v3232 = vshrl.u32 %v3231, 7
    %v3233 = vsub.s32 0, %v3232
    %v3234 = vrot.slane %v3230, %v3233
    %v3235 = vadd.f32 %v3227, %v3234
    %v3236 = vmul.f32 %v3235, 0.01
    %v3237 = vmax.f32 %v3235, %v3236
    %v3238 = vld [vmem:[#allocation2 + $0x2c0] sm:$0xff]
    %v3239 = vld [vmem:[#allocation2 + $0x2c8] sm:$0xff]
    %v3240 = vld [vmem:[#allocation2 + $0x2d0] sm:$0xff]
    %v3241 = vld [vmem:[#allocation2 + $0x2d8] sm:$0xff]
    %v3242 = vld [vmem:[#allocation2 + $0x2e0] sm:$0x1]
    %v3243 = vlaneseq
    %v3244 = vshrl.u32 %v3243, 7
    %v3245 = vsub.s32 0, %v3244
    %v3246 = vrot.slane %v3242, %v3245
    %v3248 = vsel %vm1179, %v3237, 0
    %3250 = vmatprep.subr.mxu0 0.0
    %3251 = vmatpush1.msra.mxu0 0.0
    %3252 = vmatprep.subr.mxu0 0.0
    %3253 = vmatpush1.msra.mxu0 0.0
    %3254 = vmatprep.subr.mxu0 0.0
    %3255 = vmatpush1.msra.mxu0 0.0
    %3256 = vmatprep.subr.mxu0 0.0
    %3257 = vmatpush1.msra.mxu0 0.0
    %3258 = vmatprep.subr.mxu0 0.0
    %3259 = vmatpush1.msra.mxu0 0.0
    %3260 = vmatprep.subr.mxu0 0.0
    %3261 = vmatpush1.msra.mxu0 0.0
    %3262 = vmatprep.subr.mxu0 0.0
    %3263 = vmatpush1.msra.mxu0 0.0
    %3264 = vmatprep.subr.mxu0 0.0
    %3265 = vmatpush1.msra.mxu0 0.0
    %3266 = vmatprep.subr.mxu0 0.0
    %3267 = vmatpush1.msra.mxu0 0.0
    %3268 = vmatprep.subr.mxu0 0.0
    %3269 = vmatpush1.msra.mxu0 0.0
    %3270 = vmatprep.subr.mxu0 0.0
    %3271 = vmatpush1.msra.mxu0 0.0
    %3272 = vmatprep.subr.mxu0 0.0
    %3273 = vmatpush1.msra.mxu0 0.0
    %3274 = vmatprep.subr.mxu0 0.0
    %3275 = vmatpush1.msra.mxu0 %v3241
    %3276 = vmatprep.subr.mxu0 0.0
    %3277 = vmatpush1.msra.mxu0 %v3240
    %3278 = vmatprep.subr.mxu0 0.0
    %3279 = vmatpush1.msra.mxu0 %v3239
    %3280 = vmatprep.subr.mxu0 0.0
    %3281 = vmatpush1.msra.mxu0 %v3238
    %3282 = vmatprep.subr.mxu0 0.0
    %3283 = vmatpush2.msra.mxu0 0.0
    %3284 = vmatprep.subr.mxu0 0.0
    %3285 = vmatpush2.msra.mxu0 0.0
    %3286 = vmatprep.subr.mxu0 0.0
    %3287 = vmatpush2.msra.mxu0 0.0
    %3288 = vmatprep.subr.mxu0 0.0
    %3289 = vmatpush2.msra.mxu0 0.0
    %3290 = vmatprep.subr.mxu0 0.0
    %3291 = vmatpush2.msra.mxu0 0.0
    %3292 = vmatprep.subr.mxu0 0.0
    %3293 = vmatpush2.msra.mxu0 0.0
    %3294 = vmatprep.subr.mxu0 0.0
    %3295 = vmatpush2.msra.mxu0 0.0
    %3296 = vmatprep.subr.mxu0 0.0
    %3297 = vmatpush2.msra.mxu0 0.0
    %3298 = vmatprep.subr.mxu0 0.0
    %3299 = vmatpush2.msra.mxu0 0.0
    %3300 = vmatprep.subr.mxu0 0.0
    %3301 = vmatpush2.msra.mxu0 0.0
    %3302 = vmatprep.subr.mxu0 0.0
    %3303 = vmatpush2.msra.mxu0 0.0
    %3304 = vmatprep.subr.mxu0 0.0
    %3305 = vmatpush2.msra.mxu0 0.0
    %3306 = vmatprep.subr.mxu0 0.0
    %3307 = vmatpush2.msra.mxu0 0.0
    %3308 = vmatprep.subr.mxu0 0.0
    %3309 = vmatpush2.msra.mxu0 0.0
    %3310 = vmatprep.subr.mxu0 0.0
    %3311 = vmatpush2.msra.mxu0 0.0
    %3312 = vmatprep.subr.mxu0 0.0
    %3313 = vmatpush2.msra.mxu0 0.0
    %3314 = vmatprep.mubr.f32.mxu0 0.0
    %3315 = vmatmul.mubr.f32.gmra.mxu0 %v3248
    %v3316 = vpop.f32.mrf.mxu0
    %v3317 = vadd.f32 %v3246, %v3316
    %v3318 = vpop.f32.mrf.mxu0
    %3319 = vdwg.mxu0
    %vm3320 = vcmask 35840
    %3321 = vst.msk [vmem:[#allocation7] sm:$0xf] %vm3320, %v3317
    // Predicated region
    $region18: #{forward.1} parent=1 // pred_check
      _
    $region19: #{forward.1} parent=1 // pred_check_branch
      %3323 = sbr.rel (0) target = $region21
    $region20: #{forward.1} parent=1 // pred_region
      %s3325 = ssub.s32 64, 64
      %3326 = vsyncadd [#allocation4], %s3325
      %s3328 = sshll.u32 [#allocation7], 4
      %s3329 = int_to_ptr.vmem [resolvable:$true] %s3328
      %3331 = dma.vmem_to_hbm [thread:$0]  %s3329, 64, %s2, [#allocation4]
    $region21: #{forward.1} parent=1 // pred_fallthru
      _
    // Predicated region
    $region22: #{forward.1} parent=1 // pred_check
      _
    $region23: #{forward.1} parent=1 // pred_check_branch
      %3333 = sbr.rel (0) target = $region25
    $region24: #{forward.1} parent=1 // pred_region
      %3334 = dma.done [#allocation4], 64
    $region25: #{forward.1} parent=1 // pred_fallthru
      _
    %3335 = vsyncpa [#allocation3], 1
    %3336 = vsyncpa [#allocation6], 1
    %3337 = vsyncpa [#allocation4], 1

</llo_original>
